<compile_context>
chip_gen: v7x
topology: tpu7x:2x2x1
jax: 0.10.0
libtpu: 0.0.40
codegen_flags: <defaults>
</compile_context>

<pallas_src>
import functools

import jax
import jax.numpy as jnp
from jax.experimental import pallas as pl
from jax.experimental.pallas import tpu as pltpu

INPUT_DIM = 17
COND_DIM = 900
COND_OUT_DIM = 17
OUTPUT_DIM = 17
H1, H2 = 256, 128
BN_EPS = 1e-5


def _round_up(x, m):
    return (x + m - 1) // m * m


# ---------------------------------------------------------------------------
# Kernel
# ---------------------------------------------------------------------------
def _atcnn_kernel(ipt_ref, cond_ref,
                  w1_ref, t1_ref,
                  w2_ref, t2_ref,
                  w3_ref, t3_ref,
                  wtc_ref, wcc_ref, out_ref):
    cd = w1_ref.dtype  # MXU operand dtype (bf16 by default)

    # condition branch: [Linear(scale-folded) -> +shift -> ReLU] x 3, f32 accumulation.
    cond = cond_ref[...].astype(cd)          # cast in VMEM (no extra HBM pass)
    h = jnp.dot(cond, w1_ref[...], preferred_element_type=jnp.float32)
    h = jnp.maximum(h + t1_ref[...], 0.0)

    h = jnp.dot(h.astype(cd), w2_ref[...], preferred_element_type=jnp.float32)
    h = jnp.maximum(h + t2_ref[...], 0.0)

    h = jnp.dot(h.astype(cd), w3_ref[...], preferred_element_type=jnp.float32)
    c = jnp.maximum(h + t3_ref[...], 0.0)

    # combiner; target Linear pre-folded into wtc = Wt @ Wc[:17] on the host, and
    # the concat expressed as a split matmul (no lane-concat relayout).
    logits = (jnp.dot(ipt_ref[...].astype(cd), wtc_ref[...],
                      preferred_element_type=jnp.float32)
              + jnp.dot(c.astype(cd), wcc_ref[...],
                        preferred_element_type=jnp.float32))

    # Softmax(dim=1) in f32 with an exact divide (rows sum to 1 to f32 precision).
    m = jnp.max(logits, axis=1, keepdims=True)
    e = jnp.exp(logits - m)
    out_ref[...] = e / jnp.sum(e, axis=1, keepdims=True)


# ---------------------------------------------------------------------------
# Wrapper
# ---------------------------------------------------------------------------
def atcnn_forward(ipt, cond, fp, *, tb=1024, min_grid_steps=8):
    """Fused forward pass. `fp` comes from fold_params()."""
    B, in_dim = ipt.shape
    cond_k = cond.shape[1]
    out_dim = fp["wcc"].shape[1]

    # Batch tile:
    #  * multiple of 16 (sublane alignment), never larger than the batch needs,
    #  * capped so the "parallel" grid axis keeps >= min_grid_steps steps when the
    #    batch allows (v7x's two TensorCores only share work via the grid).
    tb = _round_up(min(tb, B), 16)
    cap = _round_up(pl.cdiv(B, min_grid_steps), 16)
    tb = max(16, min(tb, cap))
    grid = pl.cdiv(B, tb)  # ragged last block handled by Pallas (no host pad)

    def wspec(a):
        # constant weight / shift block: whole (2-D) array resident, same block every step
        return pl.BlockSpec(a.shape, lambda i: (0, 0))

    in_specs = [
        pl.BlockSpec((tb, in_dim), lambda i: (i, 0)),    # ipt tile
        pl.BlockSpec((tb, cond_k), lambda i: (i, 0)),    # cond tile (dominant DMA)
        wspec(fp["w1"]), wspec(fp["t1"]),
        wspec(fp["w2"]), wspec(fp["t2"]),
        wspec(fp["w3"]), wspec(fp["t3"]),
        wspec(fp["wtc"]), wspec(fp["wcc"]),
    ]

    return pl.pallas_call(
        _atcnn_kernel,
        out_shape=jax.ShapeDtypeStruct((B, out_dim), jnp.float32),
        grid_spec=pltpu.PrefetchScalarGridSpec(
            num_scalar_prefetch=0,
            grid=(grid,),
            in_specs=in_specs,
            out_specs=pl.BlockSpec((tb, out_dim), lambda i: (i, 0)),
        ),
        compiler_params=pltpu.CompilerParams(
            dimension_semantics=("parallel",),
            # >= v5e's 16 MiB scoped default, <= every chip's physical VMEM
            # (v7x: 64 MiB), so the big cond tile stays double-buffered.
            vmem_limit_bytes=32 * 1024 * 1024,
        ),
    )(ipt, cond,
      fp["w1"], fp["t1"],
      fp["w2"], fp["t2"],
      fp["w3"], fp["t3"],
      fp["wtc"], fp["wcc"])


# ---------------------------------------------------------------------------
# Parameters (PyTorch-equivalent init) and host-side folding
# ---------------------------------------------------------------------------
def init_raw_params(key,
                    input_dim=INPUT_DIM, cond_dim=COND_DIM,
                    cond_out_dim=COND_OUT_DIM, output_dim=OUTPUT_DIM,
                    h1=H1, h2=H2):
    """Linear weights are stored transposed, i.e. (in, out)."""
    ks = iter(jax.random.split(key, 16))

    def lin_w(fan_in, fan_out):
        bound = 1.0 / jnp.sqrt(fan_in)
        return jax.random.uniform(next(ks), (fan_in, fan_out), jnp.float32, -bound, bound)

    def lin_b(fan_in, fan_out):
        bound = 1.0 / jnp.sqrt(fan_in)
        return jax.random.uniform(next(ks), (fan_out,), jnp.float32, -bound, bound)

    def bn(n):
        k1, k2, k3, k4 = jax.random.split(next(ks), 4)
        gamma = jax.random.uniform(k1, (n,), jnp.float32, 0.5, 1.5)
        beta = jax.random.uniform(k2, (n,), jnp.float32, -0.5, 0.5)
        rmean = jax.random.uniform(k3, (n,), jnp.float32, -0.5, 0.5)
        rvar = jax.random.uniform(k4, (n,), jnp.float32, 0.5, 1.5)
        return (gamma, beta, rmean, rvar)

    return {
        "w1": lin_w(cond_dim, h1), "b1": lin_b(cond_dim, h1), "bn1": bn(h1),
        "w2": lin_w(h1, h2), "b2": lin_b(h1, h2), "bn2": bn(h2),
        "w3": lin_w(h2, cond_out_dim), "b3": lin_b(h2, cond_out_dim), "bn3": bn(cond_out_dim),
        "wt": lin_w(input_dim, input_dim),                    # target Linear, no bias
        "wc": lin_w(cond_out_dim + input_dim, output_dim),    # combiner Linear, no bias
    }


def fold_params(rp, *, compute_dtype=jnp.bfloat16, input_dim=INPUT_DIM):
    """Fold eval-mode BN into the Linear weights (per-column scale) + f32 shift,
    fold the target Linear into the combiner, and cast MXU operands."""
    cd = compute_dtype

    def fold(w, b, bn_params):
        gamma, beta, rmean, rvar = bn_params
        s = gamma / jnp.sqrt(rvar + BN_EPS)                    # (out,)
        w_folded = (w * s[None, :]).astype(cd)                 # scale into weight columns
        t = ((b - rmean) * s + beta).reshape(1, -1).astype(jnp.float32)
        return w_folded, t

    w1, t1 = fold(rp["w1"], rp["b1"], rp["bn1"])
    w2, t2 = fold(rp["w2"], rp["b2"], rp["bn2"])
    w3, t3 = fold(rp["w3"], rp["b3"], rp["bn3"])
    wci = rp["wc"][:input_dim, :]
    wcc = rp["wc"][input_dim:, :]
    wtc = rp["wt"] @ wci                                       # fold target Linear (f32)
    return {
        "w1": w1, "t1": t1,
        "w2": w2, "t2": t2,
        "w3": w3, "t3": t3,
        "wtc": wtc.astype(cd), "wcc": wcc.astype(cd),
    }


# ---------------------------------------------------------------------------
# References
# ---------------------------------------------------------------------------
def reference_raw(ipt, cond, rp):
    """Pure-f32 reference following the PyTorch module (eval-mode BatchNorm)."""
    def bn(x, p):
        gamma, beta, rmean, rvar = p
        return (x - rmean) / jnp.sqrt(rvar + BN_EPS) * gamma + beta
    t = ipt @ rp["wt"]
    h = jax.nn.relu(bn(cond @ rp["w1"] + rp["b1"], rp["bn1"]))
    h = jax.nn.relu(bn(h @ rp["w2"] + rp["b2"], rp["bn2"]))
    c = jax.nn.relu(bn(h @ rp["w3"] + rp["b3"], rp["bn3"]))
    x = jnp.concatenate([t, c], axis=1)
    return jax.nn.softmax(x @ rp["wc"], axis=1)


def reference_folded(ipt, cond, fp, compute_dtype=jnp.bfloat16):
    """Reference along the same bf16-operand / f32-accumulate path as the kernel."""
    cd = compute_dtype
    dot = functools.partial(jnp.dot, preferred_element_type=jnp.float32)
    h = jnp.maximum(dot(cond.astype(cd), fp["w1"]) + fp["t1"], 0.0)
    h = jnp.maximum(dot(h.astype(cd), fp["w2"]) + fp["t2"], 0.0)
    c = jnp.maximum(dot(h.astype(cd), fp["w3"]) + fp["t3"], 0.0)
    logits = dot(ipt.astype(cd), fp["wtc"]) + dot(c.astype(cd), fp["wcc"])
    return jax.nn.softmax(logits, axis=1)


# ---------------------------------------------------------------------------
if __name__ == "__main__":
    key = jax.random.PRNGKey(0)
    k_param, k_ipt, k_cond = jax.random.split(key, 3)

    B = 100  # not a multiple of the tile -> exercises the ragged last-block path
    raw = init_raw_params(k_param)
    folded = fold_params(raw)

    ipt = jax.random.normal(k_ipt, (B, INPUT_DIM), jnp.float32)
    cond = jax.random.normal(k_cond, (B, COND_DIM), jnp.float32)

    # default tile (auto-clamped to keep a multi-step grid) and an explicit small tile
    out = jax.block_until_ready(atcnn_forward(ipt, cond, folded))
    out_small_tb = jax.block_until_ready(
        atcnn_forward(ipt, cond, folded, tb=32, min_grid_steps=2))

    ref_bf16 = jax.block_until_ready(reference_folded(ipt, cond, folded))
    ref_f32 = jax.block_until_ready(reference_raw(ipt, cond, raw))

    assert out.shape == (B, OUTPUT_DIM)
    assert out_small_tb.shape == (B, OUTPUT_DIM)
    assert bool(jnp.all(jnp.isfinite(out)))
    assert bool(jnp.allclose(jnp.sum(out, axis=1), 1.0, atol=1e-3))
    assert bool(jnp.allclose(out, out_small_tb, atol=1e-5)), \
        float(jnp.max(jnp.abs(out - out_small_tb)))
    assert bool(jnp.allclose(out, ref_bf16, atol=5e-3)), \
        float(jnp.max(jnp.abs(out - ref_bf16)))
    assert bool(jnp.allclose(out, ref_f32, atol=5e-2)), \
        float(jnp.max(jnp.abs(out - ref_f32)))

    print("KERNEL_OK")
</pallas_src>

<mosaic_0001>
module attributes {stable_mosaic.version = 11 : i64} {
  func.func @_atcnn_kernel(%arg0: i32, %arg1: memref<16x17xf32, #tpu.memory_space<vmem>>, %arg2: memref<16x900xf32, #tpu.memory_space<vmem>>, %arg3: memref<900x256xbf16, #tpu.memory_space<vmem>>, %arg4: memref<1x256xf32, #tpu.memory_space<vmem>>, %arg5: memref<256x128xbf16, #tpu.memory_space<vmem>>, %arg6: memref<1x128xf32, #tpu.memory_space<vmem>>, %arg7: memref<128x17xbf16, #tpu.memory_space<vmem>>, %arg8: memref<1x17xf32, #tpu.memory_space<vmem>>, %arg9: memref<17x17xbf16, #tpu.memory_space<vmem>>, %arg10: memref<17x17xbf16, #tpu.memory_space<vmem>>, %arg11: memref<16x17xf32, #tpu.memory_space<vmem>>) attributes {dimension_semantics = [#tpu.dimension_semantics<parallel>], iteration_bounds = array<i64: 7>, scalar_prefetch = 0 : i64, scratch_operands = 0 : i64, tpu.core_type = #tpu.core_type<tc>, window_params = [{transform_indices = @transform_0, window_bounds = array<i64: 16, 17>}, {transform_indices = @transform_1, window_bounds = array<i64: 16, 900>}, {pipeline_mode = #tpu.pipeline_mode<synchronous>, transform_indices = @transform_2, window_bounds = array<i64: 900, 256>}, {pipeline_mode = #tpu.pipeline_mode<synchronous>, transform_indices = @transform_3, window_bounds = array<i64: 1, 256>}, {pipeline_mode = #tpu.pipeline_mode<synchronous>, transform_indices = @transform_4, window_bounds = array<i64: 256, 128>}, {pipeline_mode = #tpu.pipeline_mode<synchronous>, transform_indices = @transform_5, window_bounds = array<i64: 1, 128>}, {pipeline_mode = #tpu.pipeline_mode<synchronous>, transform_indices = @transform_6, window_bounds = array<i64: 128, 17>}, {pipeline_mode = #tpu.pipeline_mode<synchronous>, transform_indices = @transform_7, window_bounds = array<i64: 1, 17>}, {pipeline_mode = #tpu.pipeline_mode<synchronous>, transform_indices = @transform_8, window_bounds = array<i64: 17, 17>}, {pipeline_mode = #tpu.pipeline_mode<synchronous>, transform_indices = @transform_9, window_bounds = array<i64: 17, 17>}, {transform_indices = @transform_10, window_bounds = array<i64: 16, 17>}]} {
    %c0 = arith.constant 0 : index
    %c0_0 = arith.constant 0 : index
    %0 = vector.load %arg2[%c0, %c0_0] : memref<16x900xf32, #tpu.memory_space<vmem>>, vector<16x900xf32>
    %1 = arith.truncf %0 : vector<16x900xf32> to vector<16x900xbf16>
    %c0_1 = arith.constant 0 : index
    %c0_2 = arith.constant 0 : index
    %2 = vector.load %arg3[%c0_1, %c0_2] : memref<900x256xbf16, #tpu.memory_space<vmem>>, vector<900x256xbf16>
    %cst = arith.constant dense<0.000000e+00> : vector<16x256xf32>
    %3 = tpu.matmul %1, %2, %cst {dimension_numbers = #tpu.dot_dimension_numbers<[1], [0], [0], [1], [0, 0, 1, 1], [], []>} : vector<16x900xbf16>, vector<900x256xbf16>, vector<16x256xf32> -> vector<16x256xf32>
    %c0_3 = arith.constant 0 : index
    %c0_4 = arith.constant 0 : index
    %4 = vector.load %arg4[%c0_3, %c0_4] : memref<1x256xf32, #tpu.memory_space<vmem>>, vector<1x256xf32>
    %5 = vector.broadcast %4 : vector<1x256xf32> to vector<16x256xf32>
    %6 = arith.addf %3, %5 : vector<16x256xf32>
    %cst_5 = arith.constant 0.000000e+00 : f32
    %7 = vector.broadcast %cst_5 : f32 to vector<16x256xf32>
    %8 = arith.maximumf %6, %7 : vector<16x256xf32>
    %9 = arith.truncf %8 : vector<16x256xf32> to vector<16x256xbf16>
    %c0_6 = arith.constant 0 : index
    %c0_7 = arith.constant 0 : index
    %10 = vector.load %arg5[%c0_6, %c0_7] : memref<256x128xbf16, #tpu.memory_space<vmem>>, vector<256x128xbf16>
    %cst_8 = arith.constant dense<0.000000e+00> : vector<16x128xf32>
    %11 = tpu.matmul %9, %10, %cst_8 {dimension_numbers = #tpu.dot_dimension_numbers<[1], [0], [0], [1], [0, 0, 1, 1], [], []>} : vector<16x256xbf16>, vector<256x128xbf16>, vector<16x128xf32> -> vector<16x128xf32>
    %c0_9 = arith.constant 0 : index
    %c0_10 = arith.constant 0 : index
    %12 = vector.load %arg6[%c0_9, %c0_10] : memref<1x128xf32, #tpu.memory_space<vmem>>, vector<1x128xf32>
    %13 = vector.broadcast %12 : vector<1x128xf32> to vector<16x128xf32>
    %14 = arith.addf %11, %13 : vector<16x128xf32>
    %cst_11 = arith.constant 0.000000e+00 : f32
    %15 = vector.broadcast %cst_11 : f32 to vector<16x128xf32>
    %16 = arith.maximumf %14, %15 : vector<16x128xf32>
    %17 = arith.truncf %16 : vector<16x128xf32> to vector<16x128xbf16>
    %c0_12 = arith.constant 0 : index
    %c0_13 = arith.constant 0 : index
    %18 = vector.load %arg7[%c0_12, %c0_13] : memref<128x17xbf16, #tpu.memory_space<vmem>>, vector<128x17xbf16>
    %cst_14 = arith.constant dense<0.000000e+00> : vector<16x17xf32>
    %19 = tpu.matmul %17, %18, %cst_14 {dimension_numbers = #tpu.dot_dimension_numbers<[1], [0], [0], [1], [0, 0, 1, 1], [], []>} : vector<16x128xbf16>, vector<128x17xbf16>, vector<16x17xf32> -> vector<16x17xf32>
    %c0_15 = arith.constant 0 : index
    %c0_16 = arith.constant 0 : index
    %20 = vector.load %arg8[%c0_15, %c0_16] : memref<1x17xf32, #tpu.memory_space<vmem>>, vector<1x17xf32>
    %21 = vector.broadcast %20 : vector<1x17xf32> to vector<16x17xf32>
    %22 = arith.addf %19, %21 : vector<16x17xf32>
    %cst_17 = arith.constant 0.000000e+00 : f32
    %23 = vector.broadcast %cst_17 : f32 to vector<16x17xf32>
    %24 = arith.maximumf %22, %23 : vector<16x17xf32>
    %c0_18 = arith.constant 0 : index
    %c0_19 = arith.constant 0 : index
    %25 = vector.load %arg1[%c0_18, %c0_19] : memref<16x17xf32, #tpu.memory_space<vmem>>, vector<16x17xf32>
    %26 = arith.truncf %25 : vector<16x17xf32> to vector<16x17xbf16>
    %c0_20 = arith.constant 0 : index
    %c0_21 = arith.constant 0 : index
    %27 = vector.load %arg9[%c0_20, %c0_21] : memref<17x17xbf16, #tpu.memory_space<vmem>>, vector<17x17xbf16>
    %cst_22 = arith.constant dense<0.000000e+00> : vector<16x17xf32>
    %28 = tpu.matmul %26, %27, %cst_22 {dimension_numbers = #tpu.dot_dimension_numbers<[1], [0], [0], [1], [0, 0, 1, 1], [], []>} : vector<16x17xbf16>, vector<17x17xbf16>, vector<16x17xf32> -> vector<16x17xf32>
    %29 = arith.truncf %24 : vector<16x17xf32> to vector<16x17xbf16>
    %c0_23 = arith.constant 0 : index
    %c0_24 = arith.constant 0 : index
    %30 = vector.load %arg10[%c0_23, %c0_24] : memref<17x17xbf16, #tpu.memory_space<vmem>>, vector<17x17xbf16>
    %cst_25 = arith.constant dense<0.000000e+00> : vector<16x17xf32>
    %31 = tpu.matmul %29, %30, %cst_25 {dimension_numbers = #tpu.dot_dimension_numbers<[1], [0], [0], [1], [0, 0, 1, 1], [], []>} : vector<16x17xbf16>, vector<17x17xbf16>, vector<16x17xf32> -> vector<16x17xf32>
    %32 = arith.addf %28, %31 : vector<16x17xf32>
    %cst_26 = arith.constant dense<0xFF800000> : vector<16xf32>
    %33 = vector.multi_reduction <maximumf>, %32, %cst_26 [1] : vector<16x17xf32> to vector<16xf32>
    %34 = vector.shape_cast %33 : vector<16xf32> to vector<16x1xf32>
    %35 = vector.broadcast %34 : vector<16x1xf32> to vector<16x17xf32>
    %36 = arith.subf %32, %35 : vector<16x17xf32>
    %37 = math.exp %36 : vector<16x17xf32>
    %cst_27 = arith.constant dense<0.000000e+00> : vector<16xf32>
    %38 = vector.multi_reduction <add>, %37, %cst_27 [1] : vector<16x17xf32> to vector<16xf32>
    %39 = vector.shape_cast %38 : vector<16xf32> to vector<16x1xf32>
    %40 = vector.broadcast %39 : vector<16x1xf32> to vector<16x17xf32>
    %41 = arith.divf %37, %40 : vector<16x17xf32>
    %c0_28 = arith.constant 0 : index
    %c0_29 = arith.constant 0 : index
    %42 = vector.load %arg11[%c0_28, %c0_29] : memref<16x17xf32, #tpu.memory_space<vmem>>, vector<16x17xf32>
    tpu.vector_store %arg11[%c0_28, %c0_29], %41 {strides = array<i32>} : memref<16x17xf32, #tpu.memory_space<vmem>>, vector<16x17xf32>,
    return
  }
  func.func @transform_0(%arg0: i32) -> (i32, i32) {
    %c0_i32 = arith.constant 0 : i32
    %c0_i32_0 = arith.constant 0 : i32
    return %arg0, %c0_i32 : i32, i32
  }
  func.func @transform_1(%arg0: i32) -> (i32, i32) {
    %c0_i32 = arith.constant 0 : i32
    %c0_i32_0 = arith.constant 0 : i32
    return %arg0, %c0_i32 : i32, i32
  }
  func.func @transform_2(%arg0: i32) -> (i32, i32) {
    %c0_i32 = arith.constant 0 : i32
    %c0_i32_0 = arith.constant 0 : i32
    %c0_i32_1 = arith.constant 0 : i32
    return %c0_i32, %c0_i32_0 : i32, i32
  }
  func.func @transform_3(%arg0: i32) -> (i32, i32) {
    %c0_i32 = arith.constant 0 : i32
    %c0_i32_0 = arith.constant 0 : i32
    %c0_i32_1 = arith.constant 0 : i32
    return %c0_i32, %c0_i32_0 : i32, i32
  }
  func.func @transform_4(%arg0: i32) -> (i32, i32) {
    %c0_i32 = arith.constant 0 : i32
    %c0_i32_0 = arith.constant 0 : i32
    %c0_i32_1 = arith.constant 0 : i32
    return %c0_i32, %c0_i32_0 : i32, i32
  }
  func.func @transform_5(%arg0: i32) -> (i32, i32) {
    %c0_i32 = arith.constant 0 : i32
    %c0_i32_0 = arith.constant 0 : i32
    %c0_i32_1 = arith.constant 0 : i32
    return %c0_i32, %c0_i32_0 : i32, i32
  }
  func.func @transform_6(%arg0: i32) -> (i32, i32) {
    %c0_i32 = arith.constant 0 : i32
    %c0_i32_0 = arith.constant 0 : i32
    %c0_i32_1 = arith.constant 0 : i32
    return %c0_i32, %c0_i32_0 : i32, i32
  }
  func.func @transform_7(%arg0: i32) -> (i32, i32) {
    %c0_i32 = arith.constant 0 : i32
    %c0_i32_0 = arith.constant 0 : i32
    %c0_i32_1 = arith.constant 0 : i32
    return %c0_i32, %c0_i32_0 : i32, i32
  }
  func.func @transform_8(%arg0: i32) -> (i32, i32) {
    %c0_i32 = arith.constant 0 : i32
    %c0_i32_0 = arith.constant 0 : i32
    %c0_i32_1 = arith.constant 0 : i32
    return %c0_i32, %c0_i32_0 : i32, i32
  }
  func.func @transform_9(%arg0: i32) -> (i32, i32) {
    %c0_i32 = arith.constant 0 : i32
    %c0_i32_0 = arith.constant 0 : i32
    %c0_i32_1 = arith.constant 0 : i32
    return %c0_i32, %c0_i32_0 : i32, i32
  }
  func.func @transform_10(%arg0: i32) -> (i32, i32) {
    %c0_i32 = arith.constant 0 : i32
    %c0_i32_0 = arith.constant 0 : i32
    return %arg0, %c0_i32 : i32, i32
  }
}

</mosaic_0001>

<llo_original>
// kernel: tpu_custom_call.1
$region0: #{tpu_custom_call.1}
  #allocation0 [shape = 'u32[]', space=smem, size = 0x4, offset = 0x4, fixed_abs, tag = 'smem constant byte address 0x4 - core index']
  #allocation1 [shape = 'u32[144,128]{1,0:T(1,128)}', space=vmem, size = 0x12000, scoped, tag = 'internal scratch']
  %s0 = inlined_call_operand.vmem [shape: f32[100,17], index: 0, kind: input, shape index: {}]
  %s1 = inlined_call_operand.hbm [shape: f32[100,900], index: 1, kind: input, shape index: {}]
  %s2 = inlined_call_operand.hbm [shape: bf16[900,256], index: 2, kind: input, shape index: {}]
  %s3 = inlined_call_operand.vmem [shape: f32[1,256], index: 3, kind: input, shape index: {}]
  %s4 = inlined_call_operand.vmem [shape: bf16[256,128], index: 4, kind: input, shape index: {}]
  %s5 = inlined_call_operand.vmem [shape: f32[1,128], index: 5, kind: input, shape index: {}]
  %s6 = inlined_call_operand.vmem [shape: bf16[128,17], index: 6, kind: input, shape index: {}]
  %s7 = inlined_call_operand.vmem [shape: f32[1,17], index: 7, kind: input, shape index: {}]
  %s8 = inlined_call_operand.vmem [shape: bf16[17,17], index: 8, kind: input, shape index: {}]
  %s9 = inlined_call_operand.vmem [shape: bf16[17,17], index: 9, kind: input, shape index: {}]
  %s10 = inlined_call_operand.vmem [shape: f32[100,17], index: 10, kind: output, shape index: {}]
  %s11 = sld [smem:[#allocation0]]
  $region129: #{tpu_custom_call.1} parent=0
    _
  %s13 = ssub.s32 1, %s11
  %s14 = scalar_select 0, %s13, %s11
  $region1: #{tpu_custom_call.1} parent=0
    #allocation2 [shape = 'u8[131072]{0}', space=vmem, size = 0x20000, scoped, tag = 'input window, operand 1']
    #allocation3 [shape = 's32[2]{0}', space=sflag, size = 0x8, scoped, tag = 'scoped memory for tpu_custom_call.1']
    #allocation4 [shape = 'u8[462848]{0}', space=vmem, size = 0x71000, scoped, tag = 'input window, operand 2, single buffered']
    #allocation5 [shape = 's32[1]{0}', space=sflag, size = 0x4, scoped, tag = 'scoped memory for tpu_custom_call.1']
    #allocation6 [shape = 'u8[16384]{0}', space=vmem, size = 0x4000, scoped, tag = 'output window, operand 0']
    %15 = vsyncpa [#allocation3], 0
    %s16 = scalar_lea.sflag [#allocation3], 1
    %17 = vsyncpa %s16, 0
    %18 = vsyncpa [#allocation5], 0
    loop: start=0, step=1, limit=9
    $region2: #{tpu_custom_call.1} parent=1 // loop_pre_header
      _
    $region3: #{tpu_custom_call.1} parent=1 // loop_header
      %s20 = sphi 0, %s24
      %p21 = scmp.ge.s32.totalorder %s20, 9
      %s30 = sphi 0, %s32
      %s33 = sphi 0, %s30
      %s34 = sphi 0, %s33
      %s50 = sphi 0, %s34
      %s56 = sphi 0, %s58
      %s59 = sphi 0, %s56
      %s60 = sphi 0, %s59
      %s76 = sphi 0, %s60
      %s80 = sphi 0, %s80
      %s82 = sphi 0, %s80
      %s83 = sphi 0, %s82
      %s97 = sphi 0, %s83
      %s101 = sphi 0, %s101
      %s103 = sphi 0, %s101
      %s104 = sphi 0, %s103
      %s118 = sphi 0, %s104
      %s122 = sphi 0, %s122
      %s124 = sphi 0, %s122
      %s125 = sphi 0, %s124
      %s139 = sphi 0, %s125
      %s143 = sphi 0, %s143
      %s145 = sphi 0, %s143
      %s146 = sphi 0, %s145
      %s160 = sphi 0, %s146
      %s164 = sphi 0, %s164
      %s166 = sphi 0, %s164
      %s167 = sphi 0, %s166
      %s181 = sphi 0, %s167
      %s185 = sphi 0, %s185
      %s187 = sphi 0, %s185
      %s188 = sphi 0, %s187
      %s202 = sphi 0, %s188
      %s206 = sphi 0, %s206
      %s208 = sphi 0, %s206
      %s209 = sphi 0, %s208
      %s223 = sphi 0, %s209
      %s227 = sphi 0, %s227
      %s229 = sphi 0, %s227
      %s230 = sphi 0, %s229
      %s244 = sphi 0, %s230
      %s250 = sphi 0, %s252
      %s253 = sphi 0, %s250
      %s254 = sphi 0, %s253
      %s270 = sphi 0, %s254
    $region4: #{tpu_custom_call.1} parent=1 // loop_header_branch
      %23 = sbr.rel (%p21) target = $region8
    $region5: #{tpu_custom_call.1} parent=1 // loop_body
      %s25 = ssub.s32 %s20, 1
      %s26 = ssub.s32 %s20, 2
      %s27 = sadd.s32 %s20, 1
      %s28 = ssub.s32 %s20, %s27
      %p29 = scmp.eq.s32.totalorder %s28, 0
      %s31 = sadd.s32 %s30, 1
      %s32 = scalar_select %p29, %s30, %s31
      %p35 = pneg %p29
      %p36 = scmp.eq.s32.totalorder %s20, 6
      %p37 = por %p35, %p36
      %p38 = scmp.ne.s32.totalorder %s30, %s33
      %p39 = scmp.eq.s32.totalorder %s20, 0
      %p40 = por %p38, %p39
      %p41 = scmp.ne.s32.totalorder %s30, %s33
      %p42 = scmp.eq.s32.totalorder %s25, 6
      %p43 = por %p41, %p42
      %p44 = scmp.ne.s32.totalorder %s33, %s34
      %p45 = scmp.eq.s32.totalorder %s25, 0
      %p46 = por %p44, %p45
      %p47 = scmp.ne.s32.totalorder %s33, %s34
      %p48 = scmp.eq.s32.totalorder %s26, 6
      %p49 = por %p47, %p48
      %p51 = scmp.ne.s32.totalorder %s34, %s50
      %p52 = scmp.eq.s32.totalorder %s26, 0
      %p53 = por %p51, %p52
      %s54 = ssub.s32 %s20, %s27
      %p55 = scmp.eq.s32.totalorder %s54, 0
      %s57 = sadd.s32 %s56, 1
      %s58 = scalar_select %p55, %s56, %s57
      %p61 = pneg %p55
      %p62 = scmp.eq.s32.totalorder %s20, 6
      %p63 = por %p61, %p62
      %p64 = scmp.ne.s32.totalorder %s56, %s59
      %p65 = scmp.eq.s32.totalorder %s20, 0
      %p66 = por %p64, %p65
      %p67 = scmp.ne.s32.totalorder %s56, %s59
      %p68 = scmp.eq.s32.totalorder %s25, 6
      %p69 = por %p67, %p68
      %p70 = scmp.ne.s32.totalorder %s59, %s60
      %p71 = scmp.eq.s32.totalorder %s25, 0
      %p72 = por %p70, %p71
      %p73 = scmp.ne.s32.totalorder %s59, %s60
      %p74 = scmp.eq.s32.totalorder %s26, 6
      %p75 = por %p73, %p74
      %p77 = scmp.ne.s32.totalorder %s60, %s76
      %p78 = scmp.eq.s32.totalorder %s26, 0
      %p79 = por %p77, %p78
      %s81 = sadd.s32 %s80, 1
      %p84 = scmp.eq.s32.totalorder %s20, 6
      %p85 = scmp.ne.s32.totalorder %s80, %s82
      %p86 = scmp.eq.s32.totalorder %s20, 0
      %p87 = por %p85, %p86
      %p88 = scmp.ne.s32.totalorder %s80, %s82
      %p89 = scmp.eq.s32.totalorder %s25, 6
      %p90 = por %p88, %p89
      %p91 = scmp.ne.s32.totalorder %s82, %s83
      %p92 = scmp.eq.s32.totalorder %s25, 0
      %p93 = por %p91, %p92
      %p94 = scmp.ne.s32.totalorder %s82, %s83
      %p95 = scmp.eq.s32.totalorder %s26, 6
      %p96 = por %p94, %p95
      %p98 = scmp.ne.s32.totalorder %s83, %s97
      %p99 = scmp.eq.s32.totalorder %s26, 0
      %p100 = por %p98, %p99
      %s102 = sadd.s32 %s101, 1
      %p105 = scmp.eq.s32.totalorder %s20, 6
      %p106 = scmp.ne.s32.totalorder %s101, %s103
      %p107 = scmp.eq.s32.totalorder %s20, 0
      %p108 = por %p106, %p107
      %p109 = scmp.ne.s32.totalorder %s101, %s103
      %p110 = scmp.eq.s32.totalorder %s25, 6
      %p111 = por %p109, %p110
      %p112 = scmp.ne.s32.totalorder %s103, %s104
      %p113 = scmp.eq.s32.totalorder %s25, 0
      %p114 = por %p112, %p113
      %p115 = scmp.ne.s32.totalorder %s103, %s104
      %p116 = scmp.eq.s32.totalorder %s26, 6
      %p117 = por %p115, %p116
      %p119 = scmp.ne.s32.totalorder %s104, %s118
      %p120 = scmp.eq.s32.totalorder %s26, 0
      %p121 = por %p119, %p120
      %s123 = sadd.s32 %s122, 1
      %p126 = scmp.eq.s32.totalorder %s20, 6
      %p127 = scmp.ne.s32.totalorder %s122, %s124
      %p128 = scmp.eq.s32.totalorder %s20, 0
      %p129 = por %p127, %p128
      %p130 = scmp.ne.s32.totalorder %s122, %s124
      %p131 = scmp.eq.s32.totalorder %s25, 6
      %p132 = por %p130, %p131
      %p133 = scmp.ne.s32.totalorder %s124, %s125
      %p134 = scmp.eq.s32.totalorder %s25, 0
      %p135 = por %p133, %p134
      %p136 = scmp.ne.s32.totalorder %s124, %s125
      %p137 = scmp.eq.s32.totalorder %s26, 6
      %p138 = por %p136, %p137
      %p140 = scmp.ne.s32.totalorder %s125, %s139
      %p141 = scmp.eq.s32.totalorder %s26, 0
      %p142 = por %p140, %p141
      %s144 = sadd.s32 %s143, 1
      %p147 = scmp.eq.s32.totalorder %s20, 6
      %p148 = scmp.ne.s32.totalorder %s143, %s145
      %p149 = scmp.eq.s32.totalorder %s20, 0
      %p150 = por %p148, %p149
      %p151 = scmp.ne.s32.totalorder %s143, %s145
      %p152 = scmp.eq.s32.totalorder %s25, 6
      %p153 = por %p151, %p152
      %p154 = scmp.ne.s32.totalorder %s145, %s146
      %p155 = scmp.eq.s32.totalorder %s25, 0
      %p156 = por %p154, %p155
      %p157 = scmp.ne.s32.totalorder %s145, %s146
      %p158 = scmp.eq.s32.totalorder %s26, 6
      %p159 = por %p157, %p158
      %p161 = scmp.ne.s32.totalorder %s146, %s160
      %p162 = scmp.eq.s32.totalorder %s26, 0
      %p163 = por %p161, %p162
      %s165 = sadd.s32 %s164, 1
      %p168 = scmp.eq.s32.totalorder %s20, 6
      %p169 = scmp.ne.s32.totalorder %s164, %s166
      %p170 = scmp.eq.s32.totalorder %s20, 0
      %p171 = por %p169, %p170
      %p172 = scmp.ne.s32.totalorder %s164, %s166
      %p173 = scmp.eq.s32.totalorder %s25, 6
      %p174 = por %p172, %p173
      %p175 = scmp.ne.s32.totalorder %s166, %s167
      %p176 = scmp.eq.s32.totalorder %s25, 0
      %p177 = por %p175, %p176
      %p178 = scmp.ne.s32.totalorder %s166, %s167
      %p179 = scmp.eq.s32.totalorder %s26, 6
      %p180 = por %p178, %p179
      %p182 = scmp.ne.s32.totalorder %s167, %s181
      %p183 = scmp.eq.s32.totalorder %s26, 0
      %p184 = por %p182, %p183
      %s186 = sadd.s32 %s185, 1
      %p189 = scmp.eq.s32.totalorder %s20, 6
      %p190 = scmp.ne.s32.totalorder %s185, %s187
      %p191 = scmp.eq.s32.totalorder %s20, 0
      %p192 = por %p190, %p191
      %p193 = scmp.ne.s32.totalorder %s185, %s187
      %p194 = scmp.eq.s32.totalorder %s25, 6
      %p195 = por %p193, %p194
      %p196 = scmp.ne.s32.totalorder %s187, %s188
      %p197 = scmp.eq.s32.totalorder %s25, 0
      %p198 = por %p196, %p197
      %p199 = scmp.ne.s32.totalorder %s187, %s188
      %p200 = scmp.eq.s32.totalorder %s26, 6
      %p201 = por %p199, %p200
      %p203 = scmp.ne.s32.totalorder %s188, %s202
      %p204 = scmp.eq.s32.totalorder %s26, 0
      %p205 = por %p203, %p204
      %s207 = sadd.s32 %s206, 1
      %p210 = scmp.eq.s32.totalorder %s20, 6
      %p211 = scmp.ne.s32.totalorder %s206, %s208
      %p212 = scmp.eq.s32.totalorder %s20, 0
      %p213 = por %p211, %p212
      %p214 = scmp.ne.s32.totalorder %s206, %s208
      %p215 = scmp.eq.s32.totalorder %s25, 6
      %p216 = por %p214, %p215
      %p217 = scmp.ne.s32.totalorder %s208, %s209
      %p218 = scmp.eq.s32.totalorder %s25, 0
      %p219 = por %p217, %p218
      %p220 = scmp.ne.s32.totalorder %s208, %s209
      %p221 = scmp.eq.s32.totalorder %s26, 6
      %p222 = por %p220, %p221
      %p224 = scmp.ne.s32.totalorder %s209, %s223
      %p225 = scmp.eq.s32.totalorder %s26, 0
      %p226 = por %p224, %p225
      %s228 = sadd.s32 %s227, 1
      %p231 = scmp.eq.s32.totalorder %s20, 6
      %p232 = scmp.ne.s32.totalorder %s227, %s229
      %p233 = scmp.eq.s32.totalorder %s20, 0
      %p234 = por %p232, %p233
      %p235 = scmp.ne.s32.totalorder %s227, %s229
      %p236 = scmp.eq.s32.totalorder %s25, 6
      %p237 = por %p235, %p236
      %p238 = scmp.ne.s32.totalorder %s229, %s230
      %p239 = scmp.eq.s32.totalorder %s25, 0
      %p240 = por %p238, %p239
      %p241 = scmp.ne.s32.totalorder %s229, %s230
      %p242 = scmp.eq.s32.totalorder %s26, 6
      %p243 = por %p241, %p242
      %p245 = scmp.ne.s32.totalorder %s230, %s244
      %p246 = scmp.eq.s32.totalorder %s26, 0
      %p247 = por %p245, %p246
      %s248 = ssub.s32 %s20, %s27
      %p249 = scmp.eq.s32.totalorder %s248, 0
      %s251 = sadd.s32 %s250, 1
      %s252 = scalar_select %p249, %s250, %s251
      %p255 = pneg %p249
      %p256 = scmp.eq.s32.totalorder %s20, 6
      %p257 = por %p255, %p256
      %p258 = scmp.ne.s32.totalorder %s250, %s253
      %p259 = scmp.eq.s32.totalorder %s20, 0
      %p260 = por %p258, %p259
      %p261 = scmp.ne.s32.totalorder %s250, %s253
      %p262 = scmp.eq.s32.totalorder %s25, 6
      %p263 = por %p261, %p262
      %p264 = scmp.ne.s32.totalorder %s253, %s254
      %p265 = scmp.eq.s32.totalorder %s25, 0
      %p266 = por %p264, %p265
      %p267 = scmp.ne.s32.totalorder %s253, %s254
      %p268 = scmp.eq.s32.totalorder %s26, 6
      %p269 = por %p267, %p268
      %p271 = scmp.ne.s32.totalorder %s254, %s270
      %p272 = scmp.eq.s32.totalorder %s26, 0
      %p273 = por %p271, %p272
      %p274 = scmp.le.s32.totalorder 1, %s20
      %p275 = scmp.lt.s32.totalorder %s20, 8
      %p276 = pnand %p274, %p275
      %p277 = pneg %p276
      // Predicated region
      $region9: #{tpu_custom_call.1} parent=5 // pred_check
        _
      $region10: #{tpu_custom_call.1} parent=5 // pred_check_branch
        %279 = sbr.rel (%p276) target = $region12
      $region11: #{tpu_custom_call.1} parent=5 // pred_region
        %s280 = ssub.s32 %s20, 1
        // Predicated region
        $region13: #{tpu_custom_call.1} parent=11 // pred_check
          %p281 = pneg %p93
        $region14: #{tpu_custom_call.1} parent=11 // pred_check_branch
          %283 = sbr.rel (%p281) target = $region16
        $region15: #{tpu_custom_call.1} parent=11 // pred_region
          %s285 = ssub.s32 14464, 14464
          %286 = vsyncadd [#allocation5], %s285
          %s287 = sshll.u32 [#allocation4], 4
          %s288 = int_to_ptr.vmem [resolvable:$true] %s287
          %293 = dma.hbm_to_vmem [thread:$0]  %s2, 14464, %s288, [#allocation5], 128, 128, 8
        $region16: #{tpu_custom_call.1} parent=11 // pred_fallthru
          _
        // Predicated region
        $region17: #{tpu_custom_call.1} parent=11 // pred_check
          %p294 = pneg %p114
        $region18: #{tpu_custom_call.1} parent=11 // pred_check_branch
          %296 = sbr.rel (%p294) target = $region20
        $region19: #{tpu_custom_call.1} parent=11 // pred_region
          _
        $region20: #{tpu_custom_call.1} parent=11 // pred_fallthru
          _
        // Predicated region
        $region21: #{tpu_custom_call.1} parent=11 // pred_check
          %p297 = pneg %p135
        $region22: #{tpu_custom_call.1} parent=11 // pred_check_branch
          %299 = sbr.rel (%p297) target = $region24
        $region23: #{tpu_custom_call.1} parent=11 // pred_region
          _
        $region24: #{tpu_custom_call.1} parent=11 // pred_fallthru
          _
        // Predicated region
        $region25: #{tpu_custom_call.1} parent=11 // pred_check
          %p300 = pneg %p156
        $region26: #{tpu_custom_call.1} parent=11 // pred_check_branch
          %302 = sbr.rel (%p300) target = $region28
        $region27: #{tpu_custom_call.1} parent=11 // pred_region
          _
        $region28: #{tpu_custom_call.1} parent=11 // pred_fallthru
          _
        // Predicated region
        $region29: #{tpu_custom_call.1} parent=11 // pred_check
          %p303 = pneg %p177
        $region30: #{tpu_custom_call.1} parent=11 // pred_check_branch
          %305 = sbr.rel (%p303) target = $region32
        $region31: #{tpu_custom_call.1} parent=11 // pred_region
          _
        $region32: #{tpu_custom_call.1} parent=11 // pred_fallthru
          _
        // Predicated region
        $region33: #{tpu_custom_call.1} parent=11 // pred_check
          %p306 = pneg %p198
        $region34: #{tpu_custom_call.1} parent=11 // pred_check_branch
          %308 = sbr.rel (%p306) target = $region36
        $region35: #{tpu_custom_call.1} parent=11 // pred_region
          _
        $region36: #{tpu_custom_call.1} parent=11 // pred_fallthru
          _
        // Predicated region
        $region37: #{tpu_custom_call.1} parent=11 // pred_check
          %p309 = pneg %p219
        $region38: #{tpu_custom_call.1} parent=11 // pred_check_branch
          %311 = sbr.rel (%p309) target = $region40
        $region39: #{tpu_custom_call.1} parent=11 // pred_region
          _
        $region40: #{tpu_custom_call.1} parent=11 // pred_fallthru
          _
        // Predicated region
        $region41: #{tpu_custom_call.1} parent=11 // pred_check
          %p312 = pneg %p240
        $region42: #{tpu_custom_call.1} parent=11 // pred_check_branch
          %314 = sbr.rel (%p312) target = $region44
        $region43: #{tpu_custom_call.1} parent=11 // pred_region
          _
        $region44: #{tpu_custom_call.1} parent=11 // pred_fallthru
          _
      $region12: #{tpu_custom_call.1} parent=5 // pred_fallthru
        _
      %p315 = scmp.lt.s32.totalorder %s20, 7
      // Predicated region
      $region45: #{tpu_custom_call.1} parent=5 // pred_check
        %p316 = pneg %p315
      $region46: #{tpu_custom_call.1} parent=5 // pred_check_branch
        %318 = sbr.rel (%p316) target = $region48
      $region47: #{tpu_custom_call.1} parent=5 // pred_region
        // Predicated region
        $region49: #{tpu_custom_call.1} parent=47 // pred_check
          %p319 = pneg %p40
        $region50: #{tpu_custom_call.1} parent=47 // pred_check_branch
          %321 = sbr.rel (%p319) target = $region52
        $region51: #{tpu_custom_call.1} parent=47 // pred_region
          %s322 = smul.u32 2, %s20
          %s323 = ssub.s32 13, %s322
          %p324 = scmp.lt.s32.totalorder %s323, 2
          %s325 = scalar_select %p324, %s323, 2
          %s326 = smul.u32 128, %s325
          %p327 = scmp.lt.s32.totalorder %s322, 12
          %s328 = scalar_select %p327, %s322, 12
          %s329 = smul.addr %s328, 8
          %s330 = scalar_lea.vmem %s0, %s329
          %s331 = smul.u32 2, %s20
          %s332 = ssub.s32 13, %s331
          %p333 = scmp.lt.s32.totalorder %s332, 2
          %s334 = scalar_select %p333, %s332, 2
          %s335 = smul.u32 128, %s334
        $region52: #{tpu_custom_call.1} parent=47 // pred_fallthru
          _
        // Predicated region
        $region53: #{tpu_custom_call.1} parent=47 // pred_check
          %p336 = pneg %p66
        $region54: #{tpu_custom_call.1} parent=47 // pred_check_branch
          %338 = sbr.rel (%p336) target = $region56
        $region55: #{tpu_custom_call.1} parent=47 // pred_region
          %s339 = sand.u32 %s56, 1
          %s340 = scalar_lea.sflag [#allocation3], %s339
          %s341 = sand.u32 %s56, 1
          %s342 = smul.addr %s341, 128
          %s343 = scalar_lea.vmem [#allocation2], %s342
          %s344 = smul.u32 2, %s20
          %s345 = ssub.s32 13, %s344
          %p346 = scmp.lt.s32.totalorder %s345, 2
          %s347 = scalar_select %p346, %s345, 2
          %s348 = smul.u32 128, %s347
          %s349 = smul.u32 %s348, 8
          %s351 = ssub.s32 2048, %s349
          %352 = vsyncadd %s340, %s351
          %p353 = scmp.ne.s32.totalorder 0, %s349
          %s354 = smul.addr %s344, 8
          %s355 = smul.addr %s354, 128
          %s356 = scalar_lea.hbm %s1, %s355
          %s357 = smul.u32 64, %s347
          %s358 = sshll.u32 %s343, 4
          %s359 = int_to_ptr.vmem [resolvable:$true] %s358
          %s360 = sshll.u32 %s357, 4
          %364 = dma.hbm_to_vmem [thread:$0]  (%p353), %s356, %s360, %s359, %s340, 1024, 1024, 64
        $region56: #{tpu_custom_call.1} parent=47 // pred_fallthru
          _
      $region48: #{tpu_custom_call.1} parent=5 // pred_fallthru
        _
      %p365 = scmp.le.s32.totalorder 1, %s20
      %p366 = scmp.lt.s32.totalorder %s20, 8
      %p367 = pnand %p365, %p366
      %p368 = pneg %p367
      // Predicated region
      $region57: #{tpu_custom_call.1} parent=5 // pred_check
        _
      $region58: #{tpu_custom_call.1} parent=5 // pred_check_branch
        %370 = sbr.rel (%p367) target = $region60
      $region59: #{tpu_custom_call.1} parent=5 // pred_region
        %s371 = ssub.s32 %s20, 1
        %s372 = sand.u32 %s59, 1
        %s373 = scalar_lea.sflag [#allocation3], %s372
        %s374 = sand.u32 %s59, 1
        %s375 = smul.addr %s374, 128
        %s376 = scalar_lea.vmem [#allocation2], %s375
        // Predicated region
        $region61: #{tpu_custom_call.1} parent=59 // pred_check
          %p377 = pneg %p72
        $region62: #{tpu_custom_call.1} parent=59 // pred_check_branch
          %379 = sbr.rel (%p377) target = $region64
        $region63: #{tpu_custom_call.1} parent=59 // pred_region
          %380 = dma.done %s373, 2048
        $region64: #{tpu_custom_call.1} parent=59 // pred_fallthru
          _
        // Predicated region
        $region65: #{tpu_custom_call.1} parent=59 // pred_check
          %p381 = pneg %p93
        $region66: #{tpu_custom_call.1} parent=59 // pred_check_branch
          %383 = sbr.rel (%p381) target = $region68
        $region67: #{tpu_custom_call.1} parent=59 // pred_region
          %384 = dma.done [#allocation5], 14464
        $region68: #{tpu_custom_call.1} parent=59 // pred_fallthru
          _
        %s385 = smul.u32 2, %s25
        %s386 = ssub.s32 13, %s385
        %p387 = scmp.lt.s32.totalorder %s386, 2
        %s388 = scalar_select %p387, %s386, 2
        %s389 = smul.u32 128, %s388
        %p390 = scmp.lt.s32.totalorder %s385, 12
        %s391 = scalar_select %p390, %s385, 12
        %s392 = smul.addr %s391, 8
        %s393 = scalar_lea.vmem %s0, %s392
        %p394 = pneg %p46
        %p395 = pneg %p43
        %s396 = sand.u32 %s59, 1
        %s397 = scalar_lea.sflag [#allocation3], %s396
        %s398 = sand.u32 %s59, 1
        %s399 = smul.addr %s398, 128
        %s400 = scalar_lea.vmem [#allocation2], %s399
        %p401 = pneg %p72
        %p402 = pneg %p69
        %p403 = pneg %p93
        %p404 = pneg %p90
        %p405 = pneg %p114
        %p406 = pneg %p111
        %p407 = pneg %p135
        %p408 = pneg %p132
        %p409 = pneg %p156
        %p410 = pneg %p153
        %p411 = pneg %p177
        %p412 = pneg %p174
        %p413 = pneg %p198
        %p414 = pneg %p195
        %p415 = pneg %p219
        %p416 = pneg %p216
        %p417 = pneg %p240
        %p418 = pneg %p237
        %p419 = pneg %p266
        %p420 = pneg %p263
        %s421 = sand.u32 %s253, 1
        %s422 = sand.u32 %s253, 1
        %s423 = smul.addr %s422, 16
        %s424 = scalar_lea.vmem [#allocation6], %s423
        %s425 = smul.u32 2, %s25
        %s426 = ssub.s32 13, %s425
        %p427 = scmp.lt.s32.totalorder %s426, 2
        %s428 = scalar_select %p427, %s426, 2
        %s429 = smul.u32 128, %s428
        %p430 = scmp.lt.s32.totalorder %s425, 12
        %s431 = scalar_select %p430, %s425, 12
        %s432 = smul.addr %s431, 8
        %s433 = scalar_lea.vmem %s0, %s432
        %s434 = smul.u32 2, %s25
        %s435 = ssub.s32 13, %s434
        %p436 = scmp.lt.s32.totalorder %s435, 2
        %s437 = scalar_select %p436, %s435, 2
        %s438 = smul.u32 128, %s437
        %s439 = smul.u32 2, %s25
        %s440 = ssub.s32 13, %s439
        %p441 = scmp.lt.s32.totalorder %s440, 2
        %s442 = scalar_select %p441, %s440, 2
        %s443 = smul.u32 128, %s442
        %s444 = smul.u32 %s443, 8
        %s445 = smul.u32 2, %s25
        %s446 = ssub.s32 13, %s445
        %p447 = scmp.lt.s32.totalorder %s446, 2
        %s448 = scalar_select %p447, %s446, 2
        %s449 = smul.u32 128, %s448
        %v451 = vld [vmem:[%s376] sm:$0xff]
        %v452 = vld [vmem:[%s376 + $0x8] sm:$0xff]
        %v453 = vld [vmem:[%s376 + $0x10] sm:$0xff]
        %v454 = vld [vmem:[%s376 + $0x18] sm:$0xff]
        %v455 = vld [vmem:[%s376 + $0x20] sm:$0xff]
        %v456 = vld [vmem:[%s376 + $0x28] sm:$0xff]
        %v457 = vld [vmem:[%s376 + $0x30] sm:$0xff]
        %v458 = vld [vmem:[%s376 + $0x38] sm:$0xff]
        %v459 = vld [vmem:[%s376 + $0x40] sm:$0xff]
        %v460 = vld [vmem:[%s376 + $0x48] sm:$0xff]
        %v461 = vld [vmem:[%s376 + $0x50] sm:$0xff]
        %v462 = vld [vmem:[%s376 + $0x58] sm:$0xff]
        %v463 = vld [vmem:[%s376 + $0x60] sm:$0xff]
        %v464 = vld [vmem:[%s376 + $0x68] sm:$0xff]
        %v465 = vld [vmem:[%s376 + $0x70] sm:$0xff]
        %v466 = vld [vmem:[%s376 + $0x78] sm:$0xff]
        %v467 = vpack.c.bf16 %v459, %v451
        %v468 = vpack.c.bf16 %v460, %v452
        %v469 = vpack.c.bf16 %v461, %v453
        %v470 = vpack.c.bf16 %v462, %v454
        %v471 = vpack.c.bf16 %v463, %v455
        %v472 = vpack.c.bf16 %v464, %v456
        %v473 = vpack.c.bf16 %v465, %v457
        %v474 = vpack.c.bf16 %v466, %v458
        %v475 = vld [vmem:[#allocation4] sm:$0xff]
        %v476 = vld [vmem:[#allocation4 + $0x8] sm:$0xff]
        %v477 = vld [vmem:[#allocation4 + $0x10] sm:$0xff]
        %v478 = vld [vmem:[#allocation4 + $0x18] sm:$0xff]
        %v479 = vld [vmem:[#allocation4 + $0x20] sm:$0xff]
        %v480 = vld [vmem:[#allocation4 + $0x28] sm:$0xff]
        %v481 = vld [vmem:[#allocation4 + $0x30] sm:$0xff]
        %v482 = vld [vmem:[#allocation4 + $0x38] sm:$0xff]
        %v483 = vld [vmem:[#allocation4 + $0x40] sm:$0xff]
        %v484 = vld [vmem:[#allocation4 + $0x48] sm:$0xff]
        %v485 = vld [vmem:[#allocation4 + $0x50] sm:$0xff]
        %v486 = vld [vmem:[#allocation4 + $0x58] sm:$0xff]
        %v487 = vld [vmem:[#allocation4 + $0x60] sm:$0xff]
        %v488 = vld [vmem:[#allocation4 + $0x68] sm:$0xff]
        %v489 = vld [vmem:[#allocation4 + $0x70] sm:$0xff]
        %v490 = vld [vmem:[#allocation4 + $0x78] sm:$0xff]
        %v491 = vld [vmem:[#allocation4 + $0x80] sm:$0xff]
        %v492 = vld [vmem:[#allocation4 + $0x88] sm:$0xff]
        %v493 = vld [vmem:[#allocation4 + $0x90] sm:$0xff]
        %v494 = vld [vmem:[#allocation4 + $0x98] sm:$0xff]
        %v495 = vld [vmem:[#allocation4 + $0xa0] sm:$0xff]
        %v496 = vld [vmem:[#allocation4 + $0xa8] sm:$0xff]
        %v497 = vld [vmem:[#allocation4 + $0xb0] sm:$0xff]
        %v498 = vld [vmem:[#allocation4 + $0xb8] sm:$0xff]
        %v499 = vld [vmem:[#allocation4 + $0xc0] sm:$0xff]
        %v500 = vld [vmem:[#allocation4 + $0xc8] sm:$0xff]
        %v501 = vld [vmem:[#allocation4 + $0xd0] sm:$0xff]
        %v502 = vld [vmem:[#allocation4 + $0xd8] sm:$0xff]
        %v503 = vld [vmem:[#allocation4 + $0xe0] sm:$0xff]
        %v504 = vld [vmem:[#allocation4 + $0xe8] sm:$0xff]
        %v505 = vld [vmem:[#allocation4 + $0xf0] sm:$0xff]
        %v506 = vld [vmem:[#allocation4 + $0xf8] sm:$0xff]
        %v507 = vld [vmem:[#allocation4 + $0x100] sm:$0xff]
        %v508 = vld [vmem:[#allocation4 + $0x108] sm:$0xff]
        %v509 = vld [vmem:[#allocation4 + $0x110] sm:$0xff]
        %v510 = vld [vmem:[#allocation4 + $0x118] sm:$0xff]
        %v511 = vld [vmem:[#allocation4 + $0x120] sm:$0xff]
        %v512 = vld [vmem:[#allocation4 + $0x128] sm:$0xff]
        %v513 = vld [vmem:[#allocation4 + $0x130] sm:$0xff]
        %v514 = vld [vmem:[#allocation4 + $0x138] sm:$0xff]
        %v515 = vld [vmem:[#allocation4 + $0x140] sm:$0xff]
        %v516 = vld [vmem:[#allocation4 + $0x148] sm:$0xff]
        %v517 = vld [vmem:[#allocation4 + $0x150] sm:$0xff]
        %v518 = vld [vmem:[#allocation4 + $0x158] sm:$0xff]
        %v519 = vld [vmem:[#allocation4 + $0x160] sm:$0xff]
        %v520 = vld [vmem:[#allocation4 + $0x168] sm:$0xff]
        %v521 = vld [vmem:[#allocation4 + $0x170] sm:$0xff]
        %v522 = vld [vmem:[#allocation4 + $0x178] sm:$0xff]
        %v523 = vld [vmem:[#allocation4 + $0x180] sm:$0xff]
        %v524 = vld [vmem:[#allocation4 + $0x188] sm:$0xff]
        %v525 = vld [vmem:[#allocation4 + $0x190] sm:$0xff]
        %v526 = vld [vmem:[#allocation4 + $0x198] sm:$0xff]
        %v527 = vld [vmem:[#allocation4 + $0x1a0] sm:$0xff]
        %v528 = vld [vmem:[#allocation4 + $0x1a8] sm:$0xff]
        %v529 = vld [vmem:[#allocation4 + $0x1b0] sm:$0xff]
        %v530 = vld [vmem:[#allocation4 + $0x1b8] sm:$0xff]
        %v531 = vld [vmem:[#allocation4 + $0x1c0] sm:$0xff]
        %v532 = vld [vmem:[#allocation4 + $0x1c8] sm:$0xff]
        %v533 = vld [vmem:[#allocation4 + $0x1d0] sm:$0xff]
        %v534 = vld [vmem:[#allocation4 + $0x1d8] sm:$0xff]
        %v535 = vld [vmem:[#allocation4 + $0x1e0] sm:$0xff]
        %v536 = vld [vmem:[#allocation4 + $0x1e8] sm:$0xff]
        %v537 = vld [vmem:[#allocation4 + $0x1f0] sm:$0xff]
        %v538 = vld [vmem:[#allocation4 + $0x1f8] sm:$0xff]
        %v539 = vld [vmem:[#allocation4 + $0x200] sm:$0xff]
        %v540 = vld [vmem:[#allocation4 + $0x208] sm:$0xff]
        %v541 = vld [vmem:[#allocation4 + $0x210] sm:$0xff]
        %v542 = vld [vmem:[#allocation4 + $0x218] sm:$0xff]
        %v543 = vld [vmem:[#allocation4 + $0x220] sm:$0xff]
        %v544 = vld [vmem:[#allocation4 + $0x228] sm:$0xff]
        %v545 = vld [vmem:[#allocation4 + $0x230] sm:$0xff]
        %v546 = vld [vmem:[#allocation4 + $0x238] sm:$0xff]
        %v547 = vld [vmem:[#allocation4 + $0x240] sm:$0xff]
        %v548 = vld [vmem:[#allocation4 + $0x248] sm:$0xff]
        %v549 = vld [vmem:[#allocation4 + $0x250] sm:$0xff]
        %v550 = vld [vmem:[#allocation4 + $0x258] sm:$0xff]
        %v551 = vld [vmem:[#allocation4 + $0x260] sm:$0xff]
        %v552 = vld [vmem:[#allocation4 + $0x268] sm:$0xff]
        %v553 = vld [vmem:[#allocation4 + $0x270] sm:$0xff]
        %v554 = vld [vmem:[#allocation4 + $0x278] sm:$0xff]
        %v555 = vld [vmem:[#allocation4 + $0x280] sm:$0xff]
        %v556 = vld [vmem:[#allocation4 + $0x288] sm:$0xff]
        %v557 = vld [vmem:[#allocation4 + $0x290] sm:$0xff]
        %v558 = vld [vmem:[#allocation4 + $0x298] sm:$0xff]
        %v559 = vld [vmem:[#allocation4 + $0x2a0] sm:$0xff]
        %v560 = vld [vmem:[#allocation4 + $0x2a8] sm:$0xff]
        %v561 = vld [vmem:[#allocation4 + $0x2b0] sm:$0xff]
        %v562 = vld [vmem:[#allocation4 + $0x2b8] sm:$0xff]
        %v563 = vld [vmem:[#allocation4 + $0x2c0] sm:$0xff]
        %v564 = vld [vmem:[#allocation4 + $0x2c8] sm:$0xff]
        %v565 = vld [vmem:[#allocation4 + $0x2d0] sm:$0xff]
        %v566 = vld [vmem:[#allocation4 + $0x2d8] sm:$0xff]
        %v567 = vld [vmem:[#allocation4 + $0x2e0] sm:$0xff]
        %v568 = vld [vmem:[#allocation4 + $0x2e8] sm:$0xff]
        %v569 = vld [vmem:[#allocation4 + $0x2f0] sm:$0xff]
        %v570 = vld [vmem:[#allocation4 + $0x2f8] sm:$0xff]
        %v571 = vld [vmem:[#allocation4 + $0x300] sm:$0xff]
        %v572 = vld [vmem:[#allocation4 + $0x308] sm:$0xff]
        %v573 = vld [vmem:[#allocation4 + $0x310] sm:$0xff]
        %v574 = vld [vmem:[#allocation4 + $0x318] sm:$0xff]
        %v575 = vld [vmem:[#allocation4 + $0x320] sm:$0xff]
        %v576 = vld [vmem:[#allocation4 + $0x328] sm:$0xff]
        %v577 = vld [vmem:[#allocation4 + $0x330] sm:$0xff]
        %v578 = vld [vmem:[#allocation4 + $0x338] sm:$0xff]
        %v579 = vld [vmem:[#allocation4 + $0x340] sm:$0xff]
        %v580 = vld [vmem:[#allocation4 + $0x348] sm:$0xff]
        %v581 = vld [vmem:[#allocation4 + $0x350] sm:$0xff]
        %v582 = vld [vmem:[#allocation4 + $0x358] sm:$0xff]
        %v583 = vld [vmem:[#allocation4 + $0x360] sm:$0xff]
        %v584 = vld [vmem:[#allocation4 + $0x368] sm:$0xff]
        %v585 = vld [vmem:[#allocation4 + $0x370] sm:$0xff]
        %v586 = vld [vmem:[#allocation4 + $0x378] sm:$0xff]
        %v587 = vld [vmem:[#allocation4 + $0x380] sm:$0x33]
        %v588 = vld [vmem:[%s3] sm:$0x3]
        %v590 = vlaneseq
        %v591 = vshrl.u32 %v590, 7
        %v592 = vsub.s32 0, %v591
        %v593 = vrot.slane %v588, %v592
        %v594 = vlaneseq
        %v595 = vshrl.u32 %v594, 7
        %v596 = vsub.s32 1, %v595
        %v597 = vrot.slane %v588, %v596
        %v713 = vunpack.c.l.b16 %v475
        %v714 = vunpack.c.h.b16 %v475
        %v715 = vunpack.c.l.b16 %v476
        %v716 = vunpack.c.h.b16 %v476
        %v717 = vunpack.c.l.b16 %v477
        %v718 = vunpack.c.h.b16 %v477
        %v719 = vunpack.c.l.b16 %v478
        %v720 = vunpack.c.h.b16 %v478
        %v721 = vunpack.c.l.b16 %v479
        %v722 = vunpack.c.h.b16 %v479
        %v723 = vunpack.c.l.b16 %v480
        %v724 = vunpack.c.h.b16 %v480
        %v725 = vunpack.c.l.b16 %v481
        %v726 = vunpack.c.h.b16 %v481
        %v727 = vunpack.c.l.b16 %v482
        %v728 = vunpack.c.h.b16 %v482
        %v729 = vunpack.c.l.b16 %v483
        %v730 = vunpack.c.h.b16 %v483
        %v731 = vunpack.c.l.b16 %v484
        %v732 = vunpack.c.h.b16 %v484
        %v733 = vunpack.c.l.b16 %v485
        %v734 = vunpack.c.h.b16 %v485
        %v735 = vunpack.c.l.b16 %v486
        %v736 = vunpack.c.h.b16 %v486
        %v737 = vunpack.c.l.b16 %v487
        %v738 = vunpack.c.h.b16 %v487
        %v739 = vunpack.c.l.b16 %v488
        %v740 = vunpack.c.h.b16 %v488
        %v741 = vunpack.c.l.b16 %v489
        %v742 = vunpack.c.h.b16 %v489
        %v743 = vunpack.c.l.b16 %v490
        %v744 = vunpack.c.h.b16 %v490
        %v745 = vunpack.c.l.b16 %v491
        %v746 = vunpack.c.h.b16 %v491
        %v747 = vunpack.c.l.b16 %v492
        %v748 = vunpack.c.h.b16 %v492
        %v749 = vunpack.c.l.b16 %v493
        %v750 = vunpack.c.h.b16 %v493
        %v751 = vunpack.c.l.b16 %v494
        %v752 = vunpack.c.h.b16 %v494
        %v753 = vunpack.c.l.b16 %v495
        %v754 = vunpack.c.h.b16 %v495
        %v755 = vunpack.c.l.b16 %v496
        %v756 = vunpack.c.h.b16 %v496
        %v757 = vunpack.c.l.b16 %v497
        %v758 = vunpack.c.h.b16 %v497
        %v759 = vunpack.c.l.b16 %v498
        %v760 = vunpack.c.h.b16 %v498
        %v761 = vunpack.c.l.b16 %v499
        %v762 = vunpack.c.h.b16 %v499
        %v763 = vunpack.c.l.b16 %v500
        %v764 = vunpack.c.h.b16 %v500
        %v765 = vunpack.c.l.b16 %v501
        %v766 = vunpack.c.h.b16 %v501
        %v767 = vunpack.c.l.b16 %v502
        %v768 = vunpack.c.h.b16 %v502
        %v769 = vunpack.c.l.b16 %v503
        %v770 = vunpack.c.h.b16 %v503
        %v771 = vunpack.c.l.b16 %v504
        %v772 = vunpack.c.h.b16 %v504
        %v773 = vunpack.c.l.b16 %v505
        %v774 = vunpack.c.h.b16 %v505
        %v775 = vunpack.c.l.b16 %v506
        %v776 = vunpack.c.h.b16 %v506
        %v777 = vunpack.c.l.b16 %v507
        %v778 = vunpack.c.h.b16 %v507
        %v779 = vunpack.c.l.b16 %v508
        %v780 = vunpack.c.h.b16 %v508
        %v781 = vunpack.c.l.b16 %v509
        %v782 = vunpack.c.h.b16 %v509
        %v783 = vunpack.c.l.b16 %v510
        %v784 = vunpack.c.h.b16 %v510
        %v785 = vunpack.c.l.b16 %v511
        %v786 = vunpack.c.h.b16 %v511
        %v787 = vunpack.c.l.b16 %v512
        %v788 = vunpack.c.h.b16 %v512
        %v789 = vunpack.c.l.b16 %v513
        %v790 = vunpack.c.h.b16 %v513
        %v791 = vunpack.c.l.b16 %v514
        %v792 = vunpack.c.h.b16 %v514
        %v793 = vunpack.c.l.b16 %v515
        %v794 = vunpack.c.h.b16 %v515
        %v795 = vunpack.c.l.b16 %v516
        %v796 = vunpack.c.h.b16 %v516
        %v797 = vunpack.c.l.b16 %v517
        %v798 = vunpack.c.h.b16 %v517
        %v799 = vunpack.c.l.b16 %v518
        %v800 = vunpack.c.h.b16 %v518
        %v801 = vunpack.c.l.b16 %v519
        %v802 = vunpack.c.h.b16 %v519
        %v803 = vunpack.c.l.b16 %v520
        %v804 = vunpack.c.h.b16 %v520
        %v805 = vunpack.c.l.b16 %v521
        %v806 = vunpack.c.h.b16 %v521
        %v807 = vunpack.c.l.b16 %v522
        %v808 = vunpack.c.h.b16 %v522
        %v809 = vunpack.c.l.b16 %v523
        %v810 = vunpack.c.h.b16 %v523
        %v811 = vunpack.c.l.b16 %v524
        %v812 = vunpack.c.h.b16 %v524
        %v813 = vunpack.c.l.b16 %v525
        %v814 = vunpack.c.h.b16 %v525
        %v815 = vunpack.c.l.b16 %v526
        %v816 = vunpack.c.h.b16 %v526
        %v817 = vunpack.c.l.b16 %v527
        %v818 = vunpack.c.h.b16 %v527
        %v819 = vunpack.c.l.b16 %v528
        %v820 = vunpack.c.h.b16 %v528
        %v821 = vunpack.c.l.b16 %v529
        %v822 = vunpack.c.h.b16 %v529
        %v823 = vunpack.c.l.b16 %v530
        %v824 = vunpack.c.h.b16 %v530
        %v825 = vunpack.c.l.b16 %v531
        %v826 = vunpack.c.h.b16 %v531
        %v827 = vunpack.c.l.b16 %v532
        %v828 = vunpack.c.h.b16 %v532
        %v829 = vunpack.c.l.b16 %v533
        %v830 = vunpack.c.h.b16 %v533
        %v831 = vunpack.c.l.b16 %v534
        %v832 = vunpack.c.h.b16 %v534
        %v833 = vunpack.c.l.b16 %v535
        %v834 = vunpack.c.h.b16 %v535
        %v835 = vunpack.c.l.b16 %v536
        %v836 = vunpack.c.h.b16 %v536
        %v837 = vunpack.c.l.b16 %v537
        %v838 = vunpack.c.h.b16 %v537
        %v839 = vunpack.c.l.b16 %v538
        %v840 = vunpack.c.h.b16 %v538
        %v841 = vunpack.c.l.b16 %v539
        %v842 = vunpack.c.h.b16 %v539
        %v843 = vunpack.c.l.b16 %v540
        %v844 = vunpack.c.h.b16 %v540
        %v845 = vunpack.c.l.b16 %v541
        %v846 = vunpack.c.h.b16 %v541
        %v847 = vunpack.c.l.b16 %v542
        %v848 = vunpack.c.h.b16 %v542
        %v849 = vunpack.c.l.b16 %v543
        %v850 = vunpack.c.h.b16 %v543
        %v851 = vunpack.c.l.b16 %v544
        %v852 = vunpack.c.h.b16 %v544
        %v853 = vunpack.c.l.b16 %v545
        %v854 = vunpack.c.h.b16 %v545
        %v855 = vunpack.c.l.b16 %v546
        %v856 = vunpack.c.h.b16 %v546
        %v857 = vunpack.c.l.b16 %v547
        %v858 = vunpack.c.h.b16 %v547
        %v859 = vunpack.c.l.b16 %v548
        %v860 = vunpack.c.h.b16 %v548
        %v861 = vunpack.c.l.b16 %v549
        %v862 = vunpack.c.h.b16 %v549
        %v863 = vunpack.c.l.b16 %v550
        %v864 = vunpack.c.h.b16 %v550
        %v865 = vunpack.c.l.b16 %v551
        %v866 = vunpack.c.h.b16 %v551
        %v867 = vunpack.c.l.b16 %v552
        %v868 = vunpack.c.h.b16 %v552
        %v869 = vunpack.c.l.b16 %v553
        %v870 = vunpack.c.h.b16 %v553
        %v871 = vunpack.c.l.b16 %v554
        %v872 = vunpack.c.h.b16 %v554
        %v873 = vunpack.c.l.b16 %v555
        %v874 = vunpack.c.h.b16 %v555
        %v875 = vunpack.c.l.b16 %v556
        %v876 = vunpack.c.h.b16 %v556
        %v877 = vunpack.c.l.b16 %v557
        %v878 = vunpack.c.h.b16 %v557
        %v879 = vunpack.c.l.b16 %v558
        %v880 = vunpack.c.h.b16 %v558
        %v881 = vunpack.c.l.b16 %v559
        %v882 = vunpack.c.h.b16 %v559
        %v883 = vunpack.c.l.b16 %v560
        %v884 = vunpack.c.h.b16 %v560
        %v885 = vunpack.c.l.b16 %v561
        %v886 = vunpack.c.h.b16 %v561
        %v887 = vunpack.c.l.b16 %v562
        %v888 = vunpack.c.h.b16 %v562
        %v889 = vunpack.c.l.b16 %v563
        %v890 = vunpack.c.h.b16 %v563
        %v891 = vunpack.c.l.b16 %v564
        %v892 = vunpack.c.h.b16 %v564
        %v893 = vunpack.c.l.b16 %v565
        %v894 = vunpack.c.h.b16 %v565
        %v895 = vunpack.c.l.b16 %v566
        %v896 = vunpack.c.h.b16 %v566
        %v897 = vunpack.c.l.b16 %v567
        %v898 = vunpack.c.h.b16 %v567
        %v899 = vunpack.c.l.b16 %v568
        %v900 = vunpack.c.h.b16 %v568
        %v901 = vunpack.c.l.b16 %v569
        %v902 = vunpack.c.h.b16 %v569
        %v903 = vunpack.c.l.b16 %v570
        %v904 = vunpack.c.h.b16 %v570
        %v905 = vunpack.c.l.b16 %v571
        %v906 = vunpack.c.h.b16 %v571
        %v907 = vunpack.c.l.b16 %v572
        %v908 = vunpack.c.h.b16 %v572
        %v909 = vunpack.c.l.b16 %v573
        %v910 = vunpack.c.h.b16 %v573
        %v911 = vunpack.c.l.b16 %v574
        %v912 = vunpack.c.h.b16 %v574
        %v913 = vunpack.c.l.b16 %v575
        %v914 = vunpack.c.h.b16 %v575
        %v915 = vunpack.c.l.b16 %v576
        %v916 = vunpack.c.h.b16 %v576
        %v917 = vunpack.c.l.b16 %v577
        %v918 = vunpack.c.h.b16 %v577
        %v919 = vunpack.c.l.b16 %v578
        %v920 = vunpack.c.h.b16 %v578
        %v921 = vunpack.c.l.b16 %v579
        %v922 = vunpack.c.h.b16 %v579
        %v923 = vunpack.c.l.b16 %v580
        %v924 = vunpack.c.h.b16 %v580
        %v925 = vunpack.c.l.b16 %v581
        %v926 = vunpack.c.h.b16 %v581
        %v927 = vunpack.c.l.b16 %v582
        %v928 = vunpack.c.h.b16 %v582
        %v929 = vunpack.c.l.b16 %v583
        %v930 = vunpack.c.h.b16 %v583
        %v931 = vunpack.c.l.b16 %v584
        %v932 = vunpack.c.h.b16 %v584
        %v933 = vunpack.c.l.b16 %v585
        %v934 = vunpack.c.h.b16 %v585
        %v935 = vunpack.c.l.b16 %v586
        %v936 = vunpack.c.h.b16 %v586
        %v937 = vunpack.c.l.b16 %v587
        %v938 = vunpack.c.h.b16 %v587
        %v939 = vpack.c.b16 %v715, %v713
        %v940 = vpack.c.b16 %v716, %v714
        %v941 = vpack.c.b16 %v719, %v717
        %v942 = vpack.c.b16 %v720, %v718
        %v943 = vpack.c.b16 %v723, %v721
        %v944 = vpack.c.b16 %v724, %v722
        %v945 = vpack.c.b16 %v727, %v725
        %v946 = vpack.c.b16 %v728, %v726
        %v947 = vpack.c.b16 %v731, %v729
        %v948 = vpack.c.b16 %v732, %v730
        %v949 = vpack.c.b16 %v735, %v733
        %v950 = vpack.c.b16 %v736, %v734
        %v951 = vpack.c.b16 %v739, %v737
        %v952 = vpack.c.b16 %v740, %v738
        %v953 = vpack.c.b16 %v743, %v741
        %v954 = vpack.c.b16 %v744, %v742
        %v955 = vpack.c.b16 %v747, %v745
        %v956 = vpack.c.b16 %v748, %v746
        %v957 = vpack.c.b16 %v751, %v749
        %v958 = vpack.c.b16 %v752, %v750
        %v959 = vpack.c.b16 %v755, %v753
        %v960 = vpack.c.b16 %v756, %v754
        %v961 = vpack.c.b16 %v759, %v757
        %v962 = vpack.c.b16 %v760, %v758
        %v963 = vpack.c.b16 %v763, %v761
        %v964 = vpack.c.b16 %v764, %v762
        %v965 = vpack.c.b16 %v767, %v765
        %v966 = vpack.c.b16 %v768, %v766
        %v967 = vpack.c.b16 %v771, %v769
        %v968 = vpack.c.b16 %v772, %v770
        %v969 = vpack.c.b16 %v775, %v773
        %v970 = vpack.c.b16 %v776, %v774
        %v971 = vpack.c.b16 %v779, %v777
        %v972 = vpack.c.b16 %v780, %v778
        %v973 = vpack.c.b16 %v783, %v781
        %v974 = vpack.c.b16 %v784, %v782
        %v975 = vpack.c.b16 %v787, %v785
        %v976 = vpack.c.b16 %v788, %v786
        %v977 = vpack.c.b16 %v791, %v789
        %v978 = vpack.c.b16 %v792, %v790
        %v979 = vpack.c.b16 %v795, %v793
        %v980 = vpack.c.b16 %v796, %v794
        %v981 = vpack.c.b16 %v799, %v797
        %v982 = vpack.c.b16 %v800, %v798
        %v983 = vpack.c.b16 %v803, %v801
        %v984 = vpack.c.b16 %v804, %v802
        %v985 = vpack.c.b16 %v807, %v805
        %v986 = vpack.c.b16 %v808, %v806
        %v987 = vpack.c.b16 %v811, %v809
        %v988 = vpack.c.b16 %v812, %v810
        %v989 = vpack.c.b16 %v815, %v813
        %v990 = vpack.c.b16 %v816, %v814
        %v991 = vpack.c.b16 %v819, %v817
        %v992 = vpack.c.b16 %v820, %v818
        %v993 = vpack.c.b16 %v823, %v821
        %v994 = vpack.c.b16 %v824, %v822
        %v995 = vpack.c.b16 %v827, %v825
        %v996 = vpack.c.b16 %v828, %v826
        %v997 = vpack.c.b16 %v831, %v829
        %v998 = vpack.c.b16 %v832, %v830
        %v999 = vpack.c.b16 %v835, %v833
        %v1000 = vpack.c.b16 %v836, %v834
        %v1001 = vpack.c.b16 %v839, %v837
        %v1002 = vpack.c.b16 %v840, %v838
        %v1003 = vpack.c.b16 %v843, %v841
        %v1004 = vpack.c.b16 %v844, %v842
        %v1005 = vpack.c.b16 %v847, %v845
        %v1006 = vpack.c.b16 %v848, %v846
        %v1007 = vpack.c.b16 %v851, %v849
        %v1008 = vpack.c.b16 %v852, %v850
        %v1009 = vpack.c.b16 %v855, %v853
        %v1010 = vpack.c.b16 %v856, %v854
        %v1011 = vpack.c.b16 %v859, %v857
        %v1012 = vpack.c.b16 %v860, %v858
        %v1013 = vpack.c.b16 %v863, %v861
        %v1014 = vpack.c.b16 %v864, %v862
        %v1015 = vpack.c.b16 %v867, %v865
        %v1016 = vpack.c.b16 %v868, %v866
        %v1017 = vpack.c.b16 %v871, %v869
        %v1018 = vpack.c.b16 %v872, %v870
        %v1019 = vpack.c.b16 %v875, %v873
        %v1020 = vpack.c.b16 %v876, %v874
        %v1021 = vpack.c.b16 %v879, %v877
        %v1022 = vpack.c.b16 %v880, %v878
        %v1023 = vpack.c.b16 %v883, %v881
        %v1024 = vpack.c.b16 %v884, %v882
        %v1025 = vpack.c.b16 %v887, %v885
        %v1026 = vpack.c.b16 %v888, %v886
        %v1027 = vpack.c.b16 %v891, %v889
        %v1028 = vpack.c.b16 %v892, %v890
        %v1029 = vpack.c.b16 %v895, %v893
        %v1030 = vpack.c.b16 %v896, %v894
        %v1031 = vpack.c.b16 %v899, %v897
        %v1032 = vpack.c.b16 %v900, %v898
        %v1033 = vpack.c.b16 %v903, %v901
        %v1034 = vpack.c.b16 %v904, %v902
        %v1035 = vpack.c.b16 %v907, %v905
        %v1036 = vpack.c.b16 %v908, %v906
        %v1037 = vpack.c.b16 %v911, %v909
        %v1038 = vpack.c.b16 %v912, %v910
        %v1039 = vpack.c.b16 %v915, %v913
        %v1040 = vpack.c.b16 %v916, %v914
        %v1041 = vpack.c.b16 %v919, %v917
        %v1042 = vpack.c.b16 %v920, %v918
        %v1043 = vpack.c.b16 %v923, %v921
        %v1044 = vpack.c.b16 %v924, %v922
        %v1045 = vpack.c.b16 %v927, %v925
        %v1046 = vpack.c.b16 %v928, %v926
        %v1047 = vpack.c.b16 %v931, %v929
        %v1048 = vpack.c.b16 %v932, %v930
        %v1049 = vpack.c.b16 %v935, %v933
        %v1050 = vpack.c.b16 %v936, %v934
        %v1051 = vpack.c.b16 %v937, %v937
        %v1052 = vpack.c.b16 %v938, %v938
        %vm1165 = vcmask 31744
        %v1167 = vsel %vm1165, %v474, 0
        %vm1169 = vcmask 1041408
        %v1171 = vsel %vm1169, %v1051, 0
        %v1174 = vsel %vm1169, %v1052, 0
        %1176 = vmatprep.subr.bf16.mxu0 %v940
        %1177 = vmatpush1.bf16.msra.mxu0 %v939
        %1178 = vmatprep.subr.bf16.mxu0 %v942
        %1179 = vmatpush1.bf16.msra.mxu0 %v941
        %1180 = vmatprep.subr.bf16.mxu0 %v944
        %1181 = vmatpush1.bf16.msra.mxu0 %v943
        %1182 = vmatprep.subr.bf16.mxu0 %v946
        %1183 = vmatpush1.bf16.msra.mxu0 %v945
        %1184 = vmatprep.subr.bf16.mxu0 %v948
        %1185 = vmatpush1.bf16.msra.mxu0 %v947
        %1186 = vmatprep.subr.bf16.mxu0 %v950
        %1187 = vmatpush1.bf16.msra.mxu0 %v949
        %1188 = vmatprep.subr.bf16.mxu0 %v952
        %1189 = vmatpush1.bf16.msra.mxu0 %v951
        %1190 = vmatprep.subr.bf16.mxu0 %v954
        %1191 = vmatpush1.bf16.msra.mxu0 %v953
        %1192 = vmatprep.subr.bf16.mxu0 %v956
        %1193 = vmatpush1.bf16.msra.mxu0 %v955
        %1194 = vmatprep.subr.bf16.mxu0 %v958
        %1195 = vmatpush1.bf16.msra.mxu0 %v957
        %1196 = vmatprep.subr.bf16.mxu0 %v960
        %1197 = vmatpush1.bf16.msra.mxu0 %v959
        %1198 = vmatprep.subr.bf16.mxu0 %v962
        %1199 = vmatpush1.bf16.msra.mxu0 %v961
        %1200 = vmatprep.subr.bf16.mxu0 %v964
        %1201 = vmatpush1.bf16.msra.mxu0 %v963
        %1202 = vmatprep.subr.bf16.mxu0 %v966
        %1203 = vmatpush1.bf16.msra.mxu0 %v965
        %1204 = vmatprep.subr.bf16.mxu0 %v968
        %1205 = vmatpush1.bf16.msra.mxu0 %v967
        %1206 = vmatprep.subr.bf16.mxu0 %v970
        %1207 = vmatpush1.bf16.msra.mxu0 %v969
        %1208 = vmatprep.mubr.bf16.mxu0 %v468
        %1209 = vmatmul.mubr.bf16.gmra.mrb[0].mxu0 %v467
        %v1210 = vpop.f32.mrb[0].mxu0
        %v1211 = vadd.f32 %v593, %v1210
        %v1212 = vpop.f32.mrb[0].mxu0
        %v1213 = vadd.f32 %v597, %v1212
        %v1214 = vpop.f32.mrb[0].mxu0
        %v1215 = vadd.f32 %v593, %v1214
        %v1216 = vpop.f32.mrb[0].mxu0
        %v1217 = vadd.f32 %v597, %v1216
        %1218 = vdwg.mxu0
        %1219 = vmatprep.subr.bf16.mxu0 %v972
        %1220 = vmatpush1.bf16.msra.mxu0 %v971
        %1221 = vmatprep.subr.bf16.mxu0 %v974
        %1222 = vmatpush1.bf16.msra.mxu0 %v973
        %1223 = vmatprep.subr.bf16.mxu0 %v976
        %1224 = vmatpush1.bf16.msra.mxu0 %v975
        %1225 = vmatprep.subr.bf16.mxu0 %v978
        %1226 = vmatpush1.bf16.msra.mxu0 %v977
        %1227 = vmatprep.subr.bf16.mxu0 %v980
        %1228 = vmatpush1.bf16.msra.mxu0 %v979
        %1229 = vmatprep.subr.bf16.mxu0 %v982
        %1230 = vmatpush1.bf16.msra.mxu0 %v981
        %1231 = vmatprep.subr.bf16.mxu0 %v984
        %1232 = vmatpush1.bf16.msra.mxu0 %v983
        %1233 = vmatprep.subr.bf16.mxu0 %v986
        %1234 = vmatpush1.bf16.msra.mxu0 %v985
        %1235 = vmatprep.subr.bf16.mxu0 %v988
        %1236 = vmatpush1.bf16.msra.mxu0 %v987
        %1237 = vmatprep.subr.bf16.mxu0 %v990
        %1238 = vmatpush1.bf16.msra.mxu0 %v989
        %1239 = vmatprep.subr.bf16.mxu0 %v992
        %1240 = vmatpush1.bf16.msra.mxu0 %v991
        %1241 = vmatprep.subr.bf16.mxu0 %v994
        %1242 = vmatpush1.bf16.msra.mxu0 %v993
        %1243 = vmatprep.subr.bf16.mxu0 %v996
        %1244 = vmatpush1.bf16.msra.mxu0 %v995
        %1245 = vmatprep.subr.bf16.mxu0 %v998
        %1246 = vmatpush1.bf16.msra.mxu0 %v997
        %1247 = vmatprep.subr.bf16.mxu0 %v1000
        %1248 = vmatpush1.bf16.msra.mxu0 %v999
        %1249 = vmatprep.subr.bf16.mxu0 %v1002
        %1250 = vmatpush1.bf16.msra.mxu0 %v1001
        %1251 = vmatprep.mubr.bf16.mxu0 %v470
        %1252 = vmatmul.mubr.bf16.gmra.mrb[0].mxu0 %v469
        %v1253 = vpop.f32.mrb[0].mxu0
        %v1254 = vadd.f32 %v1211, %v1253
        %v1255 = vpop.f32.mrb[0].mxu0
        %v1256 = vadd.f32 %v1213, %v1255
        %v1257 = vpop.f32.mrb[0].mxu0
        %v1258 = vadd.f32 %v1215, %v1257
        %v1259 = vpop.f32.mrb[0].mxu0
        %v1260 = vadd.f32 %v1217, %v1259
        %1261 = vdwg.mxu0
        %1262 = vmatprep.subr.bf16.mxu0 %v1004
        %1263 = vmatpush1.bf16.msra.mxu0 %v1003
        %1264 = vmatprep.subr.bf16.mxu0 %v1006
        %1265 = vmatpush1.bf16.msra.mxu0 %v1005
        %1266 = vmatprep.subr.bf16.mxu0 %v1008
        %1267 = vmatpush1.bf16.msra.mxu0 %v1007
        %1268 = vmatprep.subr.bf16.mxu0 %v1010
        %1269 = vmatpush1.bf16.msra.mxu0 %v1009
        %1270 = vmatprep.subr.bf16.mxu0 %v1012
        %1271 = vmatpush1.bf16.msra.mxu0 %v1011
        %1272 = vmatprep.subr.bf16.mxu0 %v1014
        %1273 = vmatpush1.bf16.msra.mxu0 %v1013
        %1274 = vmatprep.subr.bf16.mxu0 %v1016
        %1275 = vmatpush1.bf16.msra.mxu0 %v1015
        %1276 = vmatprep.subr.bf16.mxu0 %v1018
        %1277 = vmatpush1.bf16.msra.mxu0 %v1017
        %1278 = vmatprep.subr.bf16.mxu0 %v1020
        %1279 = vmatpush1.bf16.msra.mxu0 %v1019
        %1280 = vmatprep.subr.bf16.mxu0 %v1022
        %1281 = vmatpush1.bf16.msra.mxu0 %v1021
        %1282 = vmatprep.subr.bf16.mxu0 %v1024
        %1283 = vmatpush1.bf16.msra.mxu0 %v1023
        %1284 = vmatprep.subr.bf16.mxu0 %v1026
        %1285 = vmatpush1.bf16.msra.mxu0 %v1025
        %1286 = vmatprep.subr.bf16.mxu0 %v1028
        %1287 = vmatpush1.bf16.msra.mxu0 %v1027
        %1288 = vmatprep.subr.bf16.mxu0 %v1030
        %1289 = vmatpush1.bf16.msra.mxu0 %v1029
        %1290 = vmatprep.subr.bf16.mxu0 %v1032
        %1291 = vmatpush1.bf16.msra.mxu0 %v1031
        %1292 = vmatprep.subr.bf16.mxu0 %v1034
        %1293 = vmatpush1.bf16.msra.mxu0 %v1033
        %1294 = vmatprep.mubr.bf16.mxu0 %v472
        %1295 = vmatmul.mubr.bf16.gmra.mrb[0].mxu0 %v471
        %v1296 = vpop.f32.mrb[0].mxu0
        %v1297 = vadd.f32 %v1254, %v1296
        %v1298 = vpop.f32.mrb[0].mxu0
        %v1299 = vadd.f32 %v1256, %v1298
        %v1300 = vpop.f32.mrb[0].mxu0
        %v1301 = vadd.f32 %v1258, %v1300
        %v1302 = vpop.f32.mrb[0].mxu0
        %v1303 = vadd.f32 %v1260, %v1302
        %1304 = vdwg.mxu0
        %1305 = vmatprep.subr.bf16.mxu0 %v1036
        %1306 = vmatpush1.bf16.msra.mxu0 %v1035
        %1307 = vmatprep.subr.bf16.mxu0 %v1038
        %1308 = vmatpush1.bf16.msra.mxu0 %v1037
        %1309 = vmatprep.subr.bf16.mxu0 %v1040
        %1310 = vmatpush1.bf16.msra.mxu0 %v1039
        %1311 = vmatprep.subr.bf16.mxu0 %v1042
        %1312 = vmatpush1.bf16.msra.mxu0 %v1041
        %1313 = vmatprep.subr.bf16.mxu0 %v1044
        %1314 = vmatpush1.bf16.msra.mxu0 %v1043
        %1315 = vmatprep.subr.bf16.mxu0 %v1046
        %1316 = vmatpush1.bf16.msra.mxu0 %v1045
        %1317 = vmatprep.subr.bf16.mxu0 %v1048
        %1318 = vmatpush1.bf16.msra.mxu0 %v1047
        %1319 = vmatprep.subr.bf16.mxu0 %v1050
        %1320 = vmatpush1.bf16.msra.mxu0 %v1049
        %1321 = vmatprep.subr.bf16.mxu0 %v1174
        %1322 = vmatpush1.bf16.msra.mxu0 %v1171
        %1323 = vmatprep.subr.bf16.mxu0 0
        %1324 = vmatpush1.bf16.msra.mxu0 0
        %1325 = vmatprep.subr.bf16.mxu0 0
        %1326 = vmatpush1.bf16.msra.mxu0 0
        %1327 = vmatprep.subr.bf16.mxu0 0
        %1328 = vmatpush1.bf16.msra.mxu0 0
        %1329 = vmatprep.subr.bf16.mxu0 0
        %1330 = vmatpush1.bf16.msra.mxu0 0
        %1331 = vmatprep.subr.bf16.mxu0 0
        %1332 = vmatpush1.bf16.msra.mxu0 0
        %1333 = vmatprep.subr.bf16.mxu0 0
        %1334 = vmatpush1.bf16.msra.mxu0 0
        %1335 = vmatprep.subr.bf16.mxu0 0
        %1336 = vmatpush1.bf16.msra.mxu0 0
        %1337 = vmatprep.mubr.bf16.mxu0 %v1167
        %1338 = vmatmul.mubr.bf16.gmra.mrb[0].mxu0 %v473
        %v1339 = vpop.f32.mrb[0].mxu0
        %v1340 = vadd.f32 %v1297, %v1339
        %v1341 = vpop.f32.mrb[0].mxu0
        %v1342 = vadd.f32 %v1299, %v1341
        %v1343 = vpop.f32.mrb[0].mxu0
        %v1344 = vadd.f32 %v1301, %v1343
        %v1345 = vpop.f32.mrb[0].mxu0
        %v1346 = vadd.f32 %v1303, %v1345
        %1347 = vdwg.mxu0
        %v1348 = vmax.f32 %v1340, 0.0
        %v1349 = vmax.f32 %v1342, 0.0
        %v1350 = vmax.f32 %v1344, 0.0
        %v1351 = vmax.f32 %v1346, 0.0
        %v1352 = vpack.c.bf16 %v1350, %v1348
        %v1353 = vpack.c.bf16 %v1351, %v1349
        %v1354 = vld [vmem:[%s4] sm:$0xf]
        %v1355 = vld [vmem:[%s4 + $0x4] sm:$0xf]
        %v1356 = vld [vmem:[%s4 + $0x8] sm:$0xf]
        %v1357 = vld [vmem:[%s4 + $0xc] sm:$0xf]
        %v1358 = vld [vmem:[%s4 + $0x10] sm:$0xf]
        %v1359 = vld [vmem:[%s4 + $0x14] sm:$0xf]
        %v1360 = vld [vmem:[%s4 + $0x18] sm:$0xf]
        %v1361 = vld [vmem:[%s4 + $0x1c] sm:$0xf]
        %v1362 = vld [vmem:[%s4 + $0x20] sm:$0xf]
        %v1363 = vld [vmem:[%s4 + $0x24] sm:$0xf]
        %v1364 = vld [vmem:[%s4 + $0x28] sm:$0xf]
        %v1365 = vld [vmem:[%s4 + $0x2c] sm:$0xf]
        %v1366 = vld [vmem:[%s4 + $0x30] sm:$0xf]
        %v1367 = vld [vmem:[%s4 + $0x34] sm:$0xf]
        %v1368 = vld [vmem:[%s4 + $0x38] sm:$0xf]
        %v1369 = vld [vmem:[%s4 + $0x3c] sm:$0xf]
        %v1370 = vld [vmem:[%s4 + $0x40] sm:$0xf]
        %v1371 = vld [vmem:[%s4 + $0x44] sm:$0xf]
        %v1372 = vld [vmem:[%s4 + $0x48] sm:$0xf]
        %v1373 = vld [vmem:[%s4 + $0x4c] sm:$0xf]
        %v1374 = vld [vmem:[%s4 + $0x50] sm:$0xf]
        %v1375 = vld [vmem:[%s4 + $0x54] sm:$0xf]
        %v1376 = vld [vmem:[%s4 + $0x58] sm:$0xf]
        %v1377 = vld [vmem:[%s4 + $0x5c] sm:$0xf]
        %v1378 = vld [vmem:[%s4 + $0x60] sm:$0xf]
        %v1379 = vld [vmem:[%s4 + $0x64] sm:$0xf]
        %v1380 = vld [vmem:[%s4 + $0x68] sm:$0xf]
        %v1381 = vld [vmem:[%s4 + $0x6c] sm:$0xf]
        %v1382 = vld [vmem:[%s4 + $0x70] sm:$0xf]
        %v1383 = vld [vmem:[%s4 + $0x74] sm:$0xf]
        %v1384 = vld [vmem:[%s4 + $0x78] sm:$0xf]
        %v1385 = vld [vmem:[%s4 + $0x7c] sm:$0xf]
        %v1386 = vld [vmem:[%s5] sm:$0x1]
        %v1388 = vlaneseq
        %v1389 = vshrl.u32 %v1388, 7
        %v1390 = vsub.s32 0, %v1389
        %v1391 = vrot.slane %v1386, %v1390
        %v1425 = vunpack.c.l.b16 %v1354
        %v1426 = vunpack.c.l.b16 %v1355
        %v1427 = vunpack.c.l.b16 %v1356
        %v1428 = vunpack.c.l.b16 %v1357
        %v1429 = vunpack.c.l.b16 %v1358
        %v1430 = vunpack.c.l.b16 %v1359
        %v1431 = vunpack.c.l.b16 %v1360
        %v1432 = vunpack.c.l.b16 %v1361
        %v1433 = vunpack.c.l.b16 %v1362
        %v1434 = vunpack.c.l.b16 %v1363
        %v1435 = vunpack.c.l.b16 %v1364
        %v1436 = vunpack.c.l.b16 %v1365
        %v1437 = vunpack.c.l.b16 %v1366
        %v1438 = vunpack.c.l.b16 %v1367
        %v1439 = vunpack.c.l.b16 %v1368
        %v1440 = vunpack.c.l.b16 %v1369
        %v1441 = vunpack.c.l.b16 %v1370
        %v1442 = vunpack.c.l.b16 %v1371
        %v1443 = vunpack.c.l.b16 %v1372
        %v1444 = vunpack.c.l.b16 %v1373
        %v1445 = vunpack.c.l.b16 %v1374
        %v1446 = vunpack.c.l.b16 %v1375
        %v1447 = vunpack.c.l.b16 %v1376
        %v1448 = vunpack.c.l.b16 %v1377
        %v1449 = vunpack.c.l.b16 %v1378
        %v1450 = vunpack.c.l.b16 %v1379
        %v1451 = vunpack.c.l.b16 %v1380
        %v1452 = vunpack.c.l.b16 %v1381
        %v1453 = vunpack.c.l.b16 %v1382
        %v1454 = vunpack.c.l.b16 %v1383
        %v1455 = vunpack.c.l.b16 %v1384
        %v1456 = vunpack.c.l.b16 %v1385
        %v1457 = vpack.c.b16 %v1426, %v1425
        %v1458 = vpack.c.b16 %v1428, %v1427
        %v1459 = vpack.c.b16 %v1430, %v1429
        %v1460 = vpack.c.b16 %v1432, %v1431
        %v1461 = vpack.c.b16 %v1434, %v1433
        %v1462 = vpack.c.b16 %v1436, %v1435
        %v1463 = vpack.c.b16 %v1438, %v1437
        %v1464 = vpack.c.b16 %v1440, %v1439
        %v1465 = vpack.c.b16 %v1442, %v1441
        %v1466 = vpack.c.b16 %v1444, %v1443
        %v1467 = vpack.c.b16 %v1446, %v1445
        %v1468 = vpack.c.b16 %v1448, %v1447
        %v1469 = vpack.c.b16 %v1450, %v1449
        %v1470 = vpack.c.b16 %v1452, %v1451
        %v1471 = vpack.c.b16 %v1454, %v1453
        %v1472 = vpack.c.b16 %v1456, %v1455
        %1489 = vmatprep.subr.bf16.mxu0 0
        %1490 = vmatpush1.bf16.msra.mxu0 %v1457
        %1491 = vmatprep.subr.bf16.mxu0 0
        %1492 = vmatpush1.bf16.msra.mxu0 %v1458
        %1493 = vmatprep.subr.bf16.mxu0 0
        %1494 = vmatpush1.bf16.msra.mxu0 %v1459
        %1495 = vmatprep.subr.bf16.mxu0 0
        %1496 = vmatpush1.bf16.msra.mxu0 %v1460
        %1497 = vmatprep.subr.bf16.mxu0 0
        %1498 = vmatpush1.bf16.msra.mxu0 %v1461
        %1499 = vmatprep.subr.bf16.mxu0 0
        %1500 = vmatpush1.bf16.msra.mxu0 %v1462
        %1501 = vmatprep.subr.bf16.mxu0 0
        %1502 = vmatpush1.bf16.msra.mxu0 %v1463
        %1503 = vmatprep.subr.bf16.mxu0 0
        %1504 = vmatpush1.bf16.msra.mxu0 %v1464
        %1505 = vmatprep.subr.bf16.mxu0 0
        %1506 = vmatpush1.bf16.msra.mxu0 %v1465
        %1507 = vmatprep.subr.bf16.mxu0 0
        %1508 = vmatpush1.bf16.msra.mxu0 %v1466
        %1509 = vmatprep.subr.bf16.mxu0 0
        %1510 = vmatpush1.bf16.msra.mxu0 %v1467
        %1511 = vmatprep.subr.bf16.mxu0 0
        %1512 = vmatpush1.bf16.msra.mxu0 %v1468
        %1513 = vmatprep.subr.bf16.mxu0 0
        %1514 = vmatpush1.bf16.msra.mxu0 %v1469
        %1515 = vmatprep.subr.bf16.mxu0 0
        %1516 = vmatpush1.bf16.msra.mxu0 %v1470
        %1517 = vmatprep.subr.bf16.mxu0 0
        %1518 = vmatpush1.bf16.msra.mxu0 %v1471
        %1519 = vmatprep.subr.bf16.mxu0 0
        %1520 = vmatpush1.bf16.msra.mxu0 %v1472
        %1521 = vmatprep.mubr.bf16.mxu0 %v1353
        %1522 = vmatmul.mubr.bf16.gmra.mrb[0].mxu0 %v1352
        %v1523 = vpop.f32.mrb[0].mxu0
        %v1524 = vadd.f32 %v1391, %v1523
        %v1525 = vpop.f32.mrb[0].mxu0
        %v1526 = vpop.f32.mrb[0].mxu0
        %v1527 = vadd.f32 %v1391, %v1526
        %v1528 = vpop.f32.mrb[0].mxu0
        %1529 = vdwg.mxu0
        %v1530 = vmax.f32 %v1524, 0.0
        %v1531 = vmax.f32 %v1527, 0.0
        %v1532 = vpack.c.bf16 %v1531, %v1530
        %v1533 = vld [vmem:[%s6] sm:$0xf]
        %v1534 = vld [vmem:[%s6 + $0x4] sm:$0xf]
        %v1535 = vld [vmem:[%s6 + $0x8] sm:$0xf]
        %v1536 = vld [vmem:[%s6 + $0xc] sm:$0xf]
        %v1537 = vld [vmem:[%s6 + $0x10] sm:$0xf]
        %v1538 = vld [vmem:[%s6 + $0x14] sm:$0xf]
        %v1539 = vld [vmem:[%s6 + $0x18] sm:$0xf]
        %v1540 = vld [vmem:[%s6 + $0x1c] sm:$0xf]
        %v1541 = vld [vmem:[%s6 + $0x20] sm:$0xf]
        %v1542 = vld [vmem:[%s6 + $0x24] sm:$0xf]
        %v1543 = vld [vmem:[%s6 + $0x28] sm:$0xf]
        %v1544 = vld [vmem:[%s6 + $0x2c] sm:$0xf]
        %v1545 = vld [vmem:[%s6 + $0x30] sm:$0xf]
        %v1546 = vld [vmem:[%s6 + $0x34] sm:$0xf]
        %v1547 = vld [vmem:[%s6 + $0x38] sm:$0xf]
        %v1548 = vld [vmem:[%s6 + $0x3c] sm:$0xf]
        %v1549 = vld [vmem:[%s7] sm:$0x1]
        %v1551 = vlaneseq
        %v1552 = vshrl.u32 %v1551, 7
        %v1553 = vsub.s32 0, %v1552
        %v1554 = vrot.slane %v1549, %v1553
        %v1572 = vunpack.c.l.b16 %v1533
        %v1573 = vunpack.c.l.b16 %v1534
        %v1574 = vunpack.c.l.b16 %v1535
        %v1575 = vunpack.c.l.b16 %v1536
        %v1576 = vunpack.c.l.b16 %v1537
        %v1577 = vunpack.c.l.b16 %v1538
        %v1578 = vunpack.c.l.b16 %v1539
        %v1579 = vunpack.c.l.b16 %v1540
        %v1580 = vunpack.c.l.b16 %v1541
        %v1581 = vunpack.c.l.b16 %v1542
        %v1582 = vunpack.c.l.b16 %v1543
        %v1583 = vunpack.c.l.b16 %v1544
        %v1584 = vunpack.c.l.b16 %v1545
        %v1585 = vunpack.c.l.b16 %v1546
        %v1586 = vunpack.c.l.b16 %v1547
        %v1587 = vunpack.c.l.b16 %v1548
        %v1588 = vpack.c.b16 %v1573, %v1572
        %v1589 = vpack.c.b16 %v1575, %v1574
        %v1590 = vpack.c.b16 %v1577, %v1576
        %v1591 = vpack.c.b16 %v1579, %v1578
        %v1592 = vpack.c.b16 %v1581, %v1580
        %v1593 = vpack.c.b16 %v1583, %v1582
        %v1594 = vpack.c.b16 %v1585, %v1584
        %v1595 = vpack.c.b16 %v1587, %v1586
        %1604 = vmatprep.subr.bf16.mxu0 0
        %1605 = vmatpush1.bf16.msra.mxu0 %v1588
        %1606 = vmatprep.subr.bf16.mxu0 0
        %1607 = vmatpush1.bf16.msra.mxu0 %v1589
        %1608 = vmatprep.subr.bf16.mxu0 0
        %1609 = vmatpush1.bf16.msra.mxu0 %v1590
        %1610 = vmatprep.subr.bf16.mxu0 0
        %1611 = vmatpush1.bf16.msra.mxu0 %v1591
        %1612 = vmatprep.subr.bf16.mxu0 0
        %1613 = vmatpush1.bf16.msra.mxu0 %v1592
        %1614 = vmatprep.subr.bf16.mxu0 0
        %1615 = vmatpush1.bf16.msra.mxu0 %v1593
        %1616 = vmatprep.subr.bf16.mxu0 0
        %1617 = vmatpush1.bf16.msra.mxu0 %v1594
        %1618 = vmatprep.subr.bf16.mxu0 0
        %1619 = vmatpush1.bf16.msra.mxu0 %v1595
        %1620 = vmatprep.subr.bf16.mxu0 0
        %1621 = vmatpush1.bf16.msra.mxu0 0
        %1622 = vmatprep.subr.bf16.mxu0 0
        %1623 = vmatpush1.bf16.msra.mxu0 0
        %1624 = vmatprep.subr.bf16.mxu0 0
        %1625 = vmatpush1.bf16.msra.mxu0 0
        %1626 = vmatprep.subr.bf16.mxu0 0
        %1627 = vmatpush1.bf16.msra.mxu0 0
        %1628 = vmatprep.subr.bf16.mxu0 0
        %1629 = vmatpush1.bf16.msra.mxu0 0
        %1630 = vmatprep.subr.bf16.mxu0 0
        %1631 = vmatpush1.bf16.msra.mxu0 0
        %1632 = vmatprep.subr.bf16.mxu0 0
        %1633 = vmatpush1.bf16.msra.mxu0 0
        %1634 = vmatprep.subr.bf16.mxu0 0
        %1635 = vmatpush1.bf16.msra.mxu0 0
        %1636 = vmatprep.mubr.bf16.mxu0 0
        %1637 = vmatmul.mubr.bf16.gmra.mrb[0].mxu0 %v1532
        %v1638 = vpop.f32.mrb[0].mxu0
        %v1639 = vadd.f32 %v1554, %v1638
        %v1640 = vpop.f32.mrb[0].mxu0
        %v1641 = vpop.f32.mrb[0].mxu0
        %v1642 = vadd.f32 %v1554, %v1641
        %v1643 = vpop.f32.mrb[0].mxu0
        %1644 = vdwg.mxu0
        %v1645 = vmax.f32 %v1639, 0.0
        %v1646 = vmax.f32 %v1642, 0.0
        %v1647 = vld [vmem:[%s433] sm:$0xff]
        %v1648 = vld [vmem:[%s433 + $0x8] sm:$0xff]
        %v1649 = vpack.c.bf16 %v1648, %v1647
        %v1650 = vld [vmem:[%s8] sm:$0xf]
        %v1651 = vld [vmem:[%s8 + $0x4] sm:$0xf]
        %v1652 = vld [vmem:[%s8 + $0x8] sm:$0x1]
        %v1653 = vpack.c.bf16 %v1646, %v1645
        %v1654 = vld [vmem:[%s9] sm:$0xf]
        %v1655 = vld [vmem:[%s9 + $0x4] sm:$0xf]
        %v1656 = vld [vmem:[%s9 + $0x8] sm:$0x1]
        %v1660 = vunpack.c.l.b16 %v1654
        %v1661 = vunpack.c.l.b16 %v1655
        %v1662 = vunpack.c.l.b16 %v1656
        %v1663 = vpack.c.b16 %v1661, %v1660
        %v1664 = vpack.c.b16 %v1662, %v1662
        %vm1666 = vcmask 138240
        %v1668 = vsel %vm1666, %v1653, 0
        %vm1670 = vcmask 1040384
        %v1671 = vsel 0, 4294967295, 65535
        %v1672 = vsel %vm1670, %v1671, 0
        %v1674 = vand.u32 %v1664, %v1672
        %1676 = vmatprep.subr.bf16.mxu0 0
        %1677 = vmatpush1.bf16.msra.mxu0 %v1663
        %1678 = vmatprep.subr.bf16.mxu0 0
        %1679 = vmatpush1.bf16.msra.mxu0 %v1674
        %1680 = vmatprep.subr.bf16.mxu0 0
        %1681 = vmatpush1.bf16.msra.mxu0 0
        %1682 = vmatprep.subr.bf16.mxu0 0
        %1683 = vmatpush1.bf16.msra.mxu0 0
        %1684 = vmatprep.subr.bf16.mxu0 0
        %1685 = vmatpush1.bf16.msra.mxu0 0
        %1686 = vmatprep.subr.bf16.mxu0 0
        %1687 = vmatpush1.bf16.msra.mxu0 0
        %1688 = vmatprep.subr.bf16.mxu0 0
        %1689 = vmatpush1.bf16.msra.mxu0 0
        %1690 = vmatprep.subr.bf16.mxu0 0
        %1691 = vmatpush1.bf16.msra.mxu0 0
        %1692 = vmatprep.subr.bf16.mxu0 0
        %1693 = vmatpush1.bf16.msra.mxu0 0
        %1694 = vmatprep.subr.bf16.mxu0 0
        %1695 = vmatpush1.bf16.msra.mxu0 0
        %1696 = vmatprep.subr.bf16.mxu0 0
        %1697 = vmatpush1.bf16.msra.mxu0 0
        %1698 = vmatprep.subr.bf16.mxu0 0
        %1699 = vmatpush1.bf16.msra.mxu0 0
        %1700 = vmatprep.subr.bf16.mxu0 0
        %1701 = vmatpush1.bf16.msra.mxu0 0
        %1702 = vmatprep.subr.bf16.mxu0 0
        %1703 = vmatpush1.bf16.msra.mxu0 0
        %1704 = vmatprep.subr.bf16.mxu0 0
        %1705 = vmatpush1.bf16.msra.mxu0 0
        %1706 = vmatprep.subr.bf16.mxu0 0
        %1707 = vmatpush1.bf16.msra.mxu0 0
        %1708 = vmatprep.mubr.bf16.mxu0 0
        %1709 = vmatmul.mubr.bf16.gmra.mrb[0].mxu0 %v1668
        %v1710 = vpop.f32.mrb[0].mxu0
        %v1711 = vadd.f32 0.0, %v1710
        %v1712 = vpop.f32.mrb[0].mxu0
        %v1713 = vpop.f32.mrb[0].mxu0
        %v1714 = vadd.f32 0.0, %v1713
        %v1715 = vpop.f32.mrb[0].mxu0
        %1716 = vdwg.mxu0
        %v1720 = vunpack.c.l.b16 %v1650
        %v1721 = vunpack.c.l.b16 %v1651
        %v1722 = vunpack.c.l.b16 %v1652
        %v1723 = vpack.c.b16 %v1721, %v1720
        %v1724 = vpack.c.b16 %v1722, %v1722
        %v1727 = vsel %vm1666, %v1649, 0
        %v1730 = vand.u32 %v1724, %v1672
        %1732 = vmatprep.subr.bf16.mxu0 0
        %1733 = vmatpush1.bf16.msra.mxu0 %v1723
        %1734 = vmatprep.subr.bf16.mxu0 0
        %1735 = vmatpush1.bf16.msra.mxu0 %v1730
        %1736 = vmatprep.subr.bf16.mxu0 0
        %1737 = vmatpush1.bf16.msra.mxu0 0
        %1738 = vmatprep.subr.bf16.mxu0 0
        %1739 = vmatpush1.bf16.msra.mxu0 0
        %1740 = vmatprep.subr.bf16.mxu0 0
        %1741 = vmatpush1.bf16.msra.mxu0 0
        %1742 = vmatprep.subr.bf16.mxu0 0
        %1743 = vmatpush1.bf16.msra.mxu0 0
        %1744 = vmatprep.subr.bf16.mxu0 0
        %1745 = vmatpush1.bf16.msra.mxu0 0
        %1746 = vmatprep.subr.bf16.mxu0 0
        %1747 = vmatpush1.bf16.msra.mxu0 0
        %1748 = vmatprep.subr.bf16.mxu0 0
        %1749 = vmatpush1.bf16.msra.mxu0 0
        %1750 = vmatprep.subr.bf16.mxu0 0
        %1751 = vmatpush1.bf16.msra.mxu0 0
        %1752 = vmatprep.subr.bf16.mxu0 0
        %1753 = vmatpush1.bf16.msra.mxu0 0
        %1754 = vmatprep.subr.bf16.mxu0 0
        %1755 = vmatpush1.bf16.msra.mxu0 0
        %1756 = vmatprep.subr.bf16.mxu0 0
        %1757 = vmatpush1.bf16.msra.mxu0 0
        %1758 = vmatprep.subr.bf16.mxu0 0
        %1759 = vmatpush1.bf16.msra.mxu0 0
        %1760 = vmatprep.subr.bf16.mxu0 0
        %1761 = vmatpush1.bf16.msra.mxu0 0
        %1762 = vmatprep.subr.bf16.mxu0 0
        %1763 = vmatpush1.bf16.msra.mxu0 0
        %1764 = vmatprep.mubr.bf16.mxu0 0
        %1765 = vmatmul.mubr.bf16.gmra.mrb[0].mxu0 %v1727
        %v1766 = vpop.f32.mrb[0].mxu0
        %v1767 = vadd.f32 %v1711, %v1766
        %v1768 = vpop.f32.mrb[0].mxu0
        %v1769 = vpop.f32.mrb[0].mxu0
        %v1770 = vadd.f32 %v1714, %v1769
        %v1771 = vpop.f32.mrb[0].mxu0
        %1772 = vdwg.mxu0
        %v1773 = vsel %vm1666, %v1767, -inf
        %1774 = vmax.xlane.f32.xlu0 %v1773
        %v1775 = vpop.xlane.xlu0 %1774
        %v1776 = vsel %vm1666, %v1770, -inf
        %1777 = vmax.xlane.f32.xlu0 %v1776
        %v1778 = vpop.xlane.xlu0 %1777
        %v1779 = vsub.f32 %v1767, %v1775
        %v1780 = vsub.f32 %v1770, %v1778
        %v1781 = vmul.f32 %v1779, 1.442695
        %v1782 = vpow.pop %v1781
        %v1783 = vmul.f32 %v1780, 1.442695
        %v1784 = vpow.pop %v1783
        %v1785 = vsel %vm1666, %v1782, 0.0
        %1786 = vadd.xlane.f32.xlu0 %v1785
        %v1787 = vpop.xlane.xlu0 %1786
        %v1788 = vsel %vm1666, %v1784, 0.0
        %1789 = vadd.xlane.f32.xlu0 %v1788
        %v1790 = vpop.xlane.xlu0 %1789
        %v1791 = vrcp.pop %v1787
        %v1792 = vmul.f32 %v1782, %v1791
        %v1793 = vrcp.pop %v1790
        %v1794 = vmul.f32 %v1784, %v1793
        %1795 = vst.msk [vmem:[%s424] sm:$0xff] %vm1666, %v1792
        %1796 = vst.msk [vmem:[%s424 + $0x8] sm:$0xff] %vm1666, %v1794
        %s1797 = sand.u32 %s253, 1
        %s1798 = sand.u32 %s253, 1
        %s1799 = smul.addr %s1798, 16
        %s1800 = scalar_lea.vmem [#allocation6], %s1799
        // Predicated region
        $region69: #{tpu_custom_call.1} parent=59 // pred_check
          %p1801 = pneg %p263
        $region70: #{tpu_custom_call.1} parent=59 // pred_check_branch
          %1803 = sbr.rel (%p1801) target = $region72
        $region71: #{tpu_custom_call.1} parent=59 // pred_region
          %s1804 = smul.u32 2, %s25
          %s1805 = ssub.s32 13, %s1804
          %p1806 = scmp.lt.s32.totalorder %s1805, 2
          %s1807 = scalar_select %p1806, %s1805, 2
          %s1808 = smul.u32 128, %s1807
          %p1809 = scmp.ne.s32.totalorder 0, %s1808
          %s1810 = smul.addr %s1804, 8
          %s1811 = scalar_lea.vmem %s10, %s1810
          // Predicated region
          $region73: #{tpu_custom_call.1} parent=71 // pred_check
            %p1812 = pneg %p1809
          $region74: #{tpu_custom_call.1} parent=71 // pred_check_branch
            %1814 = sbr.rel (%p1812) target = $region76
          $region75: #{tpu_custom_call.1} parent=71 // pred_region
            // Predicated region
            $region77: #{tpu_custom_call.1} parent=75 // pred_check
              _
            $region78: #{tpu_custom_call.1} parent=75 // pred_check_branch
              %1816 = sbr.rel (0) target = $region80
            $region79: #{tpu_custom_call.1} parent=75 // pred_region
              // Predicated region
              $region99: #{tpu_custom_call.1} parent=79 // pred_check
                _
              $region100: #{tpu_custom_call.1} parent=79 // pred_check_branch
                %1867 = sbr.rel (0) target = $region102
              $region101: #{tpu_custom_call.1} parent=79 // pred_region
                %s1868 = sshrl.u32 %s1807, 1
                // While loop
                $region103: #{tpu_custom_call.1} parent=101 // loop_pre_header
                  _
                $region104: #{tpu_custom_call.1} parent=101 // loop_header
                  %s1870 = sphi 0, %s1872
                  %p1871 = scmp.ge.s32.totalorder %s1870, %s1868
                  %s1875 = sphi 0, %s1884
                  %s1876 = sphi %s1800, %s1887
                  %s1877 = sphi %s1811, %s1888
                $region105: #{tpu_custom_call.1} parent=101 // loop_header_branch
                  %1874 = sbr.rel (%p1871) target = $region109
                $region106: #{tpu_custom_call.1} parent=101 // loop_body
                  %v1878 = vld [vmem:[%s1876] sm:$0xff]
                  %1879 = vst [vmem:[%s1877] sm:$0xff] %v1878
                  %v1880 = vld [vmem:[%s1876 + $0x8] sm:$0xff]
                  %1881 = vst [vmem:[%s1877 + $0x8] sm:$0xff] %v1880
                  %s1882 = sadd.s32 1, %s1875
                  %p1883 = scmp.ge.s32.totalorder %s1882, %s1868
                  %s1884 = scalar_select %p1883, 0, %s1882
                  %s1885 = smul.u32 %s1884, 16
                  %s1886 = smul.u32 %s1884, 16
                  %s1887 = scalar_lea.vmem %s1800, %s1885 [#allocation6]
                  %s1888 = scalar_lea.vmem %s1811, %s1886
                $region107: #{tpu_custom_call.1} parent=101 // loop_footer
                  %s1872 = sadd.s32 %s1870, 1
                $region108: #{tpu_custom_call.1} parent=101 // loop_footer_branch
                  %1869 = sbr.rel target = $region104
                $region109: #{tpu_custom_call.1} parent=101 // loop_exit
                  _
                %s1889 = sshrl.u32 %s1807, 1
                %s1890 = sand.u32 %s1807, 1
                %s1891 = smul.u32 %s1889, 2
                %s1892 = smul.u32 8, %s1891
                %s1893 = scalar_lea.vmem %s1800, %s1892 [#allocation6]
                %s1894 = smul.u32 8, %s1891
                %s1895 = scalar_lea.vmem %s1811, %s1894
                // While loop
                $region110: #{tpu_custom_call.1} parent=101 // loop_pre_header
                  _
                $region111: #{tpu_custom_call.1} parent=101 // loop_header
                  %s1897 = sphi 0, %s1899
                  %p1898 = scmp.ge.s32.totalorder %s1897, %s1890
                  %s1902 = sphi 0, %s1909
                  %s1903 = sphi %s1893, %s1912
                  %s1904 = sphi %s1895, %s1913
                $region112: #{tpu_custom_call.1} parent=101 // loop_header_branch
                  %1901 = sbr.rel (%p1898) target = $region116
                $region113: #{tpu_custom_call.1} parent=101 // loop_body
                  %v1905 = vld [vmem:[%s1903] sm:$0xff]
                  %1906 = vst [vmem:[%s1904] sm:$0xff] %v1905
                  %s1907 = sadd.s32 1, %s1902
                  %p1908 = scmp.ge.s32.totalorder %s1907, %s1890
                  %s1909 = scalar_select %p1908, 0, %s1907
                  %s1910 = smul.u32 %s1909, 8
                  %s1911 = smul.u32 %s1909, 8
                  %s1912 = scalar_lea.vmem %s1893, %s1910 [#allocation6]
                  %s1913 = scalar_lea.vmem %s1895, %s1911
                $region114: #{tpu_custom_call.1} parent=101 // loop_footer
                  %s1899 = sadd.s32 %s1897, 1
                $region115: #{tpu_custom_call.1} parent=101 // loop_footer_branch
                  %1896 = sbr.rel target = $region111
                $region116: #{tpu_custom_call.1} parent=101 // loop_exit
                  _
              $region102: #{tpu_custom_call.1} parent=79 // pred_fallthru
                _
              // Predicated region
              $region117: #{tpu_custom_call.1} parent=79 // pred_check
                _
              $region118: #{tpu_custom_call.1} parent=79 // pred_check_branch
                %1915 = sbr.rel target = $region120
              $region119: #{tpu_custom_call.1} parent=79 // pred_region
                _
              $region120: #{tpu_custom_call.1} parent=79 // pred_fallthru
                _
            $region80: #{tpu_custom_call.1} parent=75 // pred_fallthru
              _
            // Predicated region
            $region81: #{tpu_custom_call.1} parent=75 // pred_check
              _
            $region82: #{tpu_custom_call.1} parent=75 // pred_check_branch
              %1818 = sbr.rel target = $region84
            $region83: #{tpu_custom_call.1} parent=75 // pred_region
              %s1820 = sshrl.u32 %s1807, 1
              // While loop
              $region85: #{tpu_custom_call.1} parent=83 // loop_pre_header
                _
              $region86: #{tpu_custom_call.1} parent=83 // loop_header
                %s1822 = sphi 0, %s1824
                %p1823 = scmp.ge.s32.totalorder %s1822, %s1820
                %s1827 = sphi 0, %s1836
                %s1828 = sphi %s1800, %s1839
                %s1829 = sphi %s1811, %s1840
              $region87: #{tpu_custom_call.1} parent=83 // loop_header_branch
                %1826 = sbr.rel (%p1823) target = $region91
              $region88: #{tpu_custom_call.1} parent=83 // loop_body
                %v1830 = vld [vmem:[%s1828] sm:$0xff]
                %1831 = vst [vmem:[%s1829] sm:$0xff] %v1830
                %v1832 = vld [vmem:[%s1828 + $0x8] sm:$0xff]
                %1833 = vst [vmem:[%s1829 + $0x8] sm:$0xff] %v1832
                %s1834 = sadd.s32 1, %s1827
                %p1835 = scmp.ge.s32.totalorder %s1834, %s1820
                %s1836 = scalar_select %p1835, 0, %s1834
                %s1837 = smul.u32 %s1836, 16
                %s1838 = smul.u32 %s1836, 16
                %s1839 = scalar_lea.vmem %s1800, %s1837 [#allocation6]
                %s1840 = scalar_lea.vmem %s1811, %s1838
              $region89: #{tpu_custom_call.1} parent=83 // loop_footer
                %s1824 = sadd.s32 %s1822, 1
              $region90: #{tpu_custom_call.1} parent=83 // loop_footer_branch
                %1821 = sbr.rel target = $region86
              $region91: #{tpu_custom_call.1} parent=83 // loop_exit
                _
              %s1841 = sshrl.u32 %s1807, 1
              %s1842 = sand.u32 %s1807, 1
              %s1843 = smul.u32 %s1841, 2
              %s1844 = smul.u32 8, %s1843
              %s1845 = scalar_lea.vmem %s1800, %s1844 [#allocation6]
              %s1846 = smul.u32 8, %s1843
              %s1847 = scalar_lea.vmem %s1811, %s1846
              // While loop
              $region92: #{tpu_custom_call.1} parent=83 // loop_pre_header
                _
              $region93: #{tpu_custom_call.1} parent=83 // loop_header
                %s1849 = sphi 0, %s1851
                %p1850 = scmp.ge.s32.totalorder %s1849, %s1842
                %s1854 = sphi 0, %s1861
                %s1855 = sphi %s1845, %s1864
                %s1856 = sphi %s1847, %s1865
              $region94: #{tpu_custom_call.1} parent=83 // loop_header_branch
                %1853 = sbr.rel (%p1850) target = $region98
              $region95: #{tpu_custom_call.1} parent=83 // loop_body
                %v1857 = vld [vmem:[%s1855] sm:$0xff]
                %1858 = vst [vmem:[%s1856] sm:$0xff] %v1857
                %s1859 = sadd.s32 1, %s1854
                %p1860 = scmp.ge.s32.totalorder %s1859, %s1842
                %s1861 = scalar_select %p1860, 0, %s1859
                %s1862 = smul.u32 %s1861, 8
                %s1863 = smul.u32 %s1861, 8
                %s1864 = scalar_lea.vmem %s1845, %s1862 [#allocation6]
                %s1865 = scalar_lea.vmem %s1847, %s1863
              $region96: #{tpu_custom_call.1} parent=83 // loop_footer
                %s1851 = sadd.s32 %s1849, 1
              $region97: #{tpu_custom_call.1} parent=83 // loop_footer_branch
                %1848 = sbr.rel target = $region93
              $region98: #{tpu_custom_call.1} parent=83 // loop_exit
                _
            $region84: #{tpu_custom_call.1} parent=75 // pred_fallthru
              _
          $region76: #{tpu_custom_call.1} parent=71 // pred_fallthru
            _
          %1916 = vnop
        $region72: #{tpu_custom_call.1} parent=59 // pred_fallthru
          _
      $region60: #{tpu_custom_call.1} parent=5 // pred_fallthru
        _
      %p1917 = scmp.le.s32.totalorder 2, %s20
      // Predicated region
      $region121: #{tpu_custom_call.1} parent=5 // pred_check
        %p1918 = pneg %p1917
      $region122: #{tpu_custom_call.1} parent=5 // pred_check_branch
        %1920 = sbr.rel (%p1918) target = $region124
      $region123: #{tpu_custom_call.1} parent=5 // pred_region
        %s1921 = ssub.s32 %s20, 2
        // Predicated region
        $region125: #{tpu_custom_call.1} parent=123 // pred_check
          %p1922 = pneg %p269
        $region126: #{tpu_custom_call.1} parent=123 // pred_check_branch
          %1924 = sbr.rel (%p1922) target = $region128
        $region127: #{tpu_custom_call.1} parent=123 // pred_region
          %s1925 = sand.u32 %s254, 1
          %s1926 = sand.u32 %s254, 1
          %s1927 = smul.addr %s1926, 16
          %s1928 = scalar_lea.vmem [#allocation6], %s1927
        $region128: #{tpu_custom_call.1} parent=123 // pred_fallthru
          _
      $region124: #{tpu_custom_call.1} parent=5 // pred_fallthru
        _
    $region6: #{tpu_custom_call.1} parent=1 // loop_footer
      %s24 = sadd.s32 1, %s20
    $region7: #{tpu_custom_call.1} parent=1 // loop_footer_branch
      %19 = sbr.rel target = $region3
    $region8: #{tpu_custom_call.1} parent=1 // loop_exit
      _
    %1929 = vsyncpa [#allocation3], 1
    %s1930 = scalar_lea.sflag [#allocation3], 1
    %1931 = vsyncpa %s1930, 1
    %1932 = vsyncpa [#allocation5], 1

</llo_original>
